<compile_context>
chip_gen: v5e
topology: v5e:2x2
jax: 0.10.0
libtpu: 0.0.40
codegen_flags: <defaults>
</compile_context>

<pallas_src>
import functools

import jax
import jax.numpy as jnp
from jax import lax
from jax.experimental import pallas as pl
from jax.experimental.pallas import tpu as pltpu


def _phase_split2(a):
    """Mod-2 space-to-depth of an (H, W, C) value.

    Returns ph[j][l] of shape (H//2, W//2, C) holding rows == j (mod 2) and
    cols == l (mod 2).  Uses only reshapes and unit-stride slices so it lowers
    cleanly on Mosaic (no strided vector loads).
    """
    H, W, C = a.shape
    r = a.reshape(H, W // 2, 2, C)
    cols = [r[:, :, 0, :], r[:, :, 1, :]]          # (H, W//2, C), col parity 0/1
    out = []
    for j in range(2):                             # row parity
        row = []
        for l in range(2):                         # col parity
            s = cols[l].reshape(H // 2, 2, W // 2, C)
            row.append(s[:, j, :, :])              # (H//2, W//2, C)
        out.append(row)
    return out


def _stem_kernel(x_ref, w1_ref, b1_ref, w2_ref, b2_ref, o_ref, y1_ref, *,
                 Ho1, Wo1, Ho2, Wo2, Cin, Cmid, Cout):
    """One batch element: conv1 (3x3 s2) -> VMEM scratch -> conv2 (3x3 s2).

    x_ref : (1, H+2, W+2, Cin)        zero-padded NHWC input (compute dtype)
    w1_ref: (9, Cin, Cmid)            conv1 weight, per-tap matrices
    b1_ref: (1, Cmid)  f32            conv1 bias
    w2_ref: (9, Cmid, Cout)           conv2 weight, per-tap matrices
    b2_ref: (1, Cout)  f32            conv2 bias
    o_ref : (1, Cout, Ho2*Wo2) f32    channels-first, spatial-last (lane-dense)
    y1_ref: (Ho1+2, Wo1+2, Cmid)      VMEM scratch: zero-padded conv1 output
    """
    # ---------------- conv1: 9 shifted-slice MACs (im2col fused in-kernel) ---
    x = x_ref[0]                                   # (Hp, Wp, Cin)
    ph = _phase_split2(x)
    acc1 = jnp.zeros((Ho1 * Wo1, Cmid), jnp.float32)
    for ky in range(3):
        for kx in range(3):
            tap = ph[ky % 2][kx % 2][ky // 2: ky // 2 + Ho1,
                                     kx // 2: kx // 2 + Wo1, :]
            acc1 = acc1 + jnp.dot(tap.reshape(Ho1 * Wo1, Cin),
                                  w1_ref[ky * 3 + kx],
                                  preferred_element_type=jnp.float32)
    y1 = acc1 + b1_ref[...]                        # bias add in f32

    # ------------- intermediate stays in VMEM (zero-padded for conv2) --------
    y1_ref[...] = jnp.zeros(y1_ref.shape, y1_ref.dtype)
    y1_ref[1:Ho1 + 1, 1:Wo1 + 1, :] = (
        y1.reshape(Ho1, Wo1, Cmid).astype(y1_ref.dtype))

    # ---------------- conv2: same structure, reading the VMEM scratch --------
    ph2 = _phase_split2(y1_ref[...])
    acc2 = jnp.zeros((Ho2 * Wo2, Cout), jnp.float32)
    for ky in range(3):
        for kx in range(3):
            tap = ph2[ky % 2][kx % 2][ky // 2: ky // 2 + Ho2,
                                      kx // 2: kx // 2 + Wo2, :]
            acc2 = acc2 + jnp.dot(tap.reshape(Ho2 * Wo2, Cmid),
                                  w2_ref[ky * 3 + kx],
                                  preferred_element_type=jnp.float32)
    y2 = acc2 + b2_ref[...]                        # (Ho2*Wo2, Cout), f32

    # channels-first / spatial-last output: lane-dense stores, NCHW for free.
    o_ref[0] = y2.T.astype(o_ref.dtype)            # (Cout, Ho2*Wo2)


def stem_conv(x_nchw, params, *, compute_dtype=jnp.bfloat16):
    """StemConv.forward: two fused DownSampling blocks.  Accepts/returns NCHW."""
    w1, b1, w2, b2 = params["w1"], params["b1"], params["w2"], params["b2"]
    K, _, Cin, Cmid = w1.shape
    Cout = w2.shape[-1]
    N, cx, H, W = x_nchw.shape
    assert cx == Cin and K == 3
    assert H % 4 == 0 and W % 4 == 0, "fused stem kernel assumes H, W divisible by 4"
    Hp, Wp = H + 2, W + 2
    Ho1, Wo1, Ho2, Wo2 = H // 2, W // 2, H // 4, W // 4

    # Host side is pure layout plumbing: NCHW->NHWC + zero pad once (1x bytes).
    x = jnp.transpose(x_nchw, (0, 2, 3, 1))
    xp = jnp.pad(x, ((0, 0), (1, 1), (1, 1), (0, 0))).astype(compute_dtype)

    w1r = w1.reshape(K * K, Cin, Cmid).astype(compute_dtype)
    w2r = w2.reshape(K * K, Cmid, Cout).astype(compute_dtype)
    b1r = b1.reshape(1, Cmid).astype(jnp.float32)
    b2r = b2.reshape(1, Cout).astype(jnp.float32)

    kernel = functools.partial(_stem_kernel, Ho1=Ho1, Wo1=Wo1, Ho2=Ho2, Wo2=Wo2,
                               Cin=Cin, Cmid=Cmid, Cout=Cout)

    out = pl.pallas_call(
        kernel,
        out_shape=jax.ShapeDtypeStruct((N, Cout, Ho2 * Wo2), jnp.float32),
        grid=(N,),
        in_specs=[
            pl.BlockSpec((1, Hp, Wp, Cin), lambda n: (n, 0, 0, 0)),   # input band
            pl.BlockSpec((K * K, Cin, Cmid), lambda n: (0, 0, 0)),    # w1 resident
            pl.BlockSpec((1, Cmid), lambda n: (0, 0)),                # b1
            pl.BlockSpec((K * K, Cmid, Cout), lambda n: (0, 0, 0)),   # w2 resident
            pl.BlockSpec((1, Cout), lambda n: (0, 0)),                # b2
        ],
        out_specs=pl.BlockSpec((1, Cout, Ho2 * Wo2), lambda n: (n, 0, 0)),
        scratch_shapes=[pltpu.VMEM((Ho1 + 2, Wo1 + 2, Cmid), compute_dtype)],
        compiler_params=pltpu.CompilerParams(
            dimension_semantics=("parallel",),
            vmem_limit_bytes=48 * 1024 * 1024),
    )(xp, w1r, b1r, w2r, b2r)

    # Output is already channels-first; just unflatten spatial -> NCHW.
    return out.reshape(N, Cout, Ho2, Wo2)


def init_params(key, in_channels, out_channels):
    """Deterministic synthetic init matching nn.Conv2d default (uniform +-1/sqrt(fan_in))."""
    mid = out_channels // 2
    k1, k2, k3, k4 = jax.random.split(key, 4)

    def conv_init(kw, kb, cin, cout, k=3):
        fan_in = cin * k * k
        bound = 1.0 / (fan_in ** 0.5)
        w = jax.random.uniform(kw, (k, k, cin, cout), jnp.float32, -bound, bound)
        b = jax.random.uniform(kb, (cout,), jnp.float32, -bound, bound)
        return w, b

    w1, b1 = conv_init(k1, k2, in_channels, mid)
    w2, b2 = conv_init(k3, k4, mid, out_channels)
    return {"w1": w1, "b1": b1, "w2": w2, "b2": b2}


def _reference(x_nchw, params):
    """Pure-JAX reference (lax conv, f32) for correctness check."""
    x = jnp.transpose(x_nchw, (0, 2, 3, 1))
    for w, b in ((params["w1"], params["b1"]), (params["w2"], params["b2"])):
        x = lax.conv_general_dilated(
            x, w, window_strides=(2, 2), padding=((1, 1), (1, 1)),
            dimension_numbers=("NHWC", "HWIO", "NHWC")) + b
    return jnp.transpose(x, (0, 3, 1, 2))


if __name__ == "__main__":
    key = jax.random.PRNGKey(0)
    kp, kx = jax.random.split(key)
    in_channels, out_channels = 3, 32
    params = init_params(kp, in_channels, out_channels)
    x = jax.random.normal(kx, (2, in_channels, 16, 16), jnp.float32)  # NCHW

    ref = jax.block_until_ready(_reference(x, params))

    # f32 path: tight numerical check of the fused structure.
    out_f32 = jax.block_until_ready(stem_conv(x, params, compute_dtype=jnp.float32))
    assert out_f32.shape == (2, out_channels, 4, 4), out_f32.shape
    assert jnp.allclose(out_f32, ref, atol=1e-4, rtol=1e-4), \
        float(jnp.max(jnp.abs(out_f32 - ref)))

    # Default bf16-operand path (perf config): f32 accumulation, looser tolerance.
    out_bf16 = jax.block_until_ready(stem_conv(x, params))
    assert out_bf16.shape == (2, out_channels, 4, 4), out_bf16.shape
    assert jnp.allclose(out_bf16, ref, atol=5e-2, rtol=5e-2), \
        float(jnp.max(jnp.abs(out_bf16 - ref)))

    print("KERNEL_OK")
</pallas_src>

<mosaic_0001>
module attributes {stable_mosaic.version = 11 : i64} {
  func.func @_stem_kernel(%arg0: i32, %arg1: memref<1x18x18x3xf32, #tpu.memory_space<vmem>>, %arg2: memref<9x3x16xf32, #tpu.memory_space<vmem>>, %arg3: memref<1x16xf32, #tpu.memory_space<vmem>>, %arg4: memref<9x16x32xf32, #tpu.memory_space<vmem>>, %arg5: memref<1x32xf32, #tpu.memory_space<vmem>>, %arg6: memref<1x32x16xf32, #tpu.memory_space<vmem>>, %arg7: memref<10x10x16xf32, #tpu.memory_space<vmem>>) attributes {dimension_semantics = [#tpu.dimension_semantics<parallel>], iteration_bounds = array<i64: 2>, scalar_prefetch = 0 : i64, scratch_operands = 1 : i64, tpu.core_type = #tpu.core_type<tc>, window_params = [{transform_indices = @transform_0, window_bounds = array<i64: 1, 18, 18, 3>}, {pipeline_mode = #tpu.pipeline_mode<synchronous>, transform_indices = @transform_1, window_bounds = array<i64: 9, 3, 16>}, {pipeline_mode = #tpu.pipeline_mode<synchronous>, transform_indices = @transform_2, window_bounds = array<i64: 1, 16>}, {pipeline_mode = #tpu.pipeline_mode<synchronous>, transform_indices = @transform_3, window_bounds = array<i64: 9, 16, 32>}, {pipeline_mode = #tpu.pipeline_mode<synchronous>, transform_indices = @transform_4, window_bounds = array<i64: 1, 32>}, {transform_indices = @transform_5, window_bounds = array<i64: 1, 32, 16>}]} {
    %c0 = arith.constant 0 : index
    %c0_0 = arith.constant 0 : index
    %c0_1 = arith.constant 0 : index
    %c0_2 = arith.constant 0 : index
    %0 = vector.load %arg1[%c0, %c0_0, %c0_1, %c0_2] : memref<1x18x18x3xf32, #tpu.memory_space<vmem>>, vector<1x18x18x3xf32>
    %1 = vector.shape_cast %0 : vector<1x18x18x3xf32> to vector<18x18x3xf32>
    %2 = vector.shape_cast %1 : vector<18x18x3xf32> to vector<18x9x2x3xf32>
    %3 = vector.extract_strided_slice %2 {offsets = [0, 0, 0, 0], sizes = [18, 9, 1, 3], strides = [1, 1, 1, 1]} : vector<18x9x2x3xf32> to vector<18x9x1x3xf32>
    %4 = vector.shape_cast %3 : vector<18x9x1x3xf32> to vector<18x9x3xf32>
    %5 = vector.extract_strided_slice %2 {offsets = [0, 0, 1, 0], sizes = [18, 9, 1, 3], strides = [1, 1, 1, 1]} : vector<18x9x2x3xf32> to vector<18x9x1x3xf32>
    %6 = vector.shape_cast %5 : vector<18x9x1x3xf32> to vector<18x9x3xf32>
    %7 = vector.shape_cast %4 : vector<18x9x3xf32> to vector<9x2x9x3xf32>
    %8 = vector.extract_strided_slice %7 {offsets = [0, 0, 0, 0], sizes = [9, 1, 9, 3], strides = [1, 1, 1, 1]} : vector<9x2x9x3xf32> to vector<9x1x9x3xf32>
    %9 = vector.shape_cast %8 : vector<9x1x9x3xf32> to vector<9x9x3xf32>
    %10 = vector.shape_cast %6 : vector<18x9x3xf32> to vector<9x2x9x3xf32>
    %11 = vector.extract_strided_slice %10 {offsets = [0, 0, 0, 0], sizes = [9, 1, 9, 3], strides = [1, 1, 1, 1]} : vector<9x2x9x3xf32> to vector<9x1x9x3xf32>
    %12 = vector.shape_cast %11 : vector<9x1x9x3xf32> to vector<9x9x3xf32>
    %13 = vector.shape_cast %4 : vector<18x9x3xf32> to vector<9x2x9x3xf32>
    %14 = vector.extract_strided_slice %13 {offsets = [0, 1, 0, 0], sizes = [9, 1, 9, 3], strides = [1, 1, 1, 1]} : vector<9x2x9x3xf32> to vector<9x1x9x3xf32>
    %15 = vector.shape_cast %14 : vector<9x1x9x3xf32> to vector<9x9x3xf32>
    %16 = vector.shape_cast %6 : vector<18x9x3xf32> to vector<9x2x9x3xf32>
    %17 = vector.extract_strided_slice %16 {offsets = [0, 1, 0, 0], sizes = [9, 1, 9, 3], strides = [1, 1, 1, 1]} : vector<9x2x9x3xf32> to vector<9x1x9x3xf32>
    %18 = vector.shape_cast %17 : vector<9x1x9x3xf32> to vector<9x9x3xf32>
    %cst = arith.constant 0.000000e+00 : f32
    %19 = vector.broadcast %cst : f32 to vector<64x16xf32>
    %20 = vector.extract_strided_slice %9 {offsets = [0, 0, 0], sizes = [8, 8, 3], strides = [1, 1, 1]} : vector<9x9x3xf32> to vector<8x8x3xf32>
    %21 = vector.shape_cast %20 : vector<8x8x3xf32> to vector<64x3xf32>
    %c0_3 = arith.constant 0 : index
    %c0_4 = arith.constant 0 : index
    %c0_5 = arith.constant 0 : index
    %22 = vector.load %arg2[%c0_3, %c0_4, %c0_5] : memref<9x3x16xf32, #tpu.memory_space<vmem>>, vector<1x3x16xf32>
    %23 = vector.shape_cast %22 : vector<1x3x16xf32> to vector<3x16xf32>
    %cst_6 = arith.constant dense<0.000000e+00> : vector<64x16xf32>
    %24 = tpu.matmul %21, %23, %cst_6 {dimension_numbers = #tpu.dot_dimension_numbers<[1], [0], [0], [1], [0, 0, 1, 1], [], []>} : vector<64x3xf32>, vector<3x16xf32>, vector<64x16xf32> -> vector<64x16xf32>
    %25 = arith.addf %19, %24 : vector<64x16xf32>
    %26 = vector.extract_strided_slice %12 {offsets = [0, 0, 0], sizes = [8, 8, 3], strides = [1, 1, 1]} : vector<9x9x3xf32> to vector<8x8x3xf32>
    %27 = vector.shape_cast %26 : vector<8x8x3xf32> to vector<64x3xf32>
    %c1 = arith.constant 1 : index
    %c0_7 = arith.constant 0 : index
    %c0_8 = arith.constant 0 : index
    %28 = vector.load %arg2[%c1, %c0_7, %c0_8] : memref<9x3x16xf32, #tpu.memory_space<vmem>>, vector<1x3x16xf32>
    %29 = vector.shape_cast %28 : vector<1x3x16xf32> to vector<3x16xf32>
    %cst_9 = arith.constant dense<0.000000e+00> : vector<64x16xf32>
    %30 = tpu.matmul %27, %29, %cst_9 {dimension_numbers = #tpu.dot_dimension_numbers<[1], [0], [0], [1], [0, 0, 1, 1], [], []>} : vector<64x3xf32>, vector<3x16xf32>, vector<64x16xf32> -> vector<64x16xf32>
    %31 = arith.addf %25, %30 : vector<64x16xf32>
    %32 = vector.extract_strided_slice %9 {offsets = [0, 1, 0], sizes = [8, 8, 3], strides = [1, 1, 1]} : vector<9x9x3xf32> to vector<8x8x3xf32>
    %33 = vector.shape_cast %32 : vector<8x8x3xf32> to vector<64x3xf32>
    %c2 = arith.constant 2 : index
    %c0_10 = arith.constant 0 : index
    %c0_11 = arith.constant 0 : index
    %34 = vector.load %arg2[%c2, %c0_10, %c0_11] : memref<9x3x16xf32, #tpu.memory_space<vmem>>, vector<1x3x16xf32>
    %35 = vector.shape_cast %34 : vector<1x3x16xf32> to vector<3x16xf32>
    %cst_12 = arith.constant dense<0.000000e+00> : vector<64x16xf32>
    %36 = tpu.matmul %33, %35, %cst_12 {dimension_numbers = #tpu.dot_dimension_numbers<[1], [0], [0], [1], [0, 0, 1, 1], [], []>} : vector<64x3xf32>, vector<3x16xf32>, vector<64x16xf32> -> vector<64x16xf32>
    %37 = arith.addf %31, %36 : vector<64x16xf32>
    %38 = vector.extract_strided_slice %15 {offsets = [0, 0, 0], sizes = [8, 8, 3], strides = [1, 1, 1]} : vector<9x9x3xf32> to vector<8x8x3xf32>
    %39 = vector.shape_cast %38 : vector<8x8x3xf32> to vector<64x3xf32>
    %c3 = arith.constant 3 : index
    %c0_13 = arith.constant 0 : index
    %c0_14 = arith.constant 0 : index
    %40 = vector.load %arg2[%c3, %c0_13, %c0_14] : memref<9x3x16xf32, #tpu.memory_space<vmem>>, vector<1x3x16xf32>
    %41 = vector.shape_cast %40 : vector<1x3x16xf32> to vector<3x16xf32>
    %cst_15 = arith.constant dense<0.000000e+00> : vector<64x16xf32>
    %42 = tpu.matmul %39, %41, %cst_15 {dimension_numbers = #tpu.dot_dimension_numbers<[1], [0], [0], [1], [0, 0, 1, 1], [], []>} : vector<64x3xf32>, vector<3x16xf32>, vector<64x16xf32> -> vector<64x16xf32>
    %43 = arith.addf %37, %42 : vector<64x16xf32>
    %44 = vector.extract_strided_slice %18 {offsets = [0, 0, 0], sizes = [8, 8, 3], strides = [1, 1, 1]} : vector<9x9x3xf32> to vector<8x8x3xf32>
    %45 = vector.shape_cast %44 : vector<8x8x3xf32> to vector<64x3xf32>
    %c4 = arith.constant 4 : index
    %c0_16 = arith.constant 0 : index
    %c0_17 = arith.constant 0 : index
    %46 = vector.load %arg2[%c4, %c0_16, %c0_17] : memref<9x3x16xf32, #tpu.memory_space<vmem>>, vector<1x3x16xf32>
    %47 = vector.shape_cast %46 : vector<1x3x16xf32> to vector<3x16xf32>
    %cst_18 = arith.constant dense<0.000000e+00> : vector<64x16xf32>
    %48 = tpu.matmul %45, %47, %cst_18 {dimension_numbers = #tpu.dot_dimension_numbers<[1], [0], [0], [1], [0, 0, 1, 1], [], []>} : vector<64x3xf32>, vector<3x16xf32>, vector<64x16xf32> -> vector<64x16xf32>
    %49 = arith.addf %43, %48 : vector<64x16xf32>
    %50 = vector.extract_strided_slice %15 {offsets = [0, 1, 0], sizes = [8, 8, 3], strides = [1, 1, 1]} : vector<9x9x3xf32> to vector<8x8x3xf32>
    %51 = vector.shape_cast %50 : vector<8x8x3xf32> to vector<64x3xf32>
    %c5 = arith.constant 5 : index
    %c0_19 = arith.constant 0 : index
    %c0_20 = arith.constant 0 : index
    %52 = vector.load %arg2[%c5, %c0_19, %c0_20] : memref<9x3x16xf32, #tpu.memory_space<vmem>>, vector<1x3x16xf32>
    %53 = vector.shape_cast %52 : vector<1x3x16xf32> to vector<3x16xf32>
    %cst_21 = arith.constant dense<0.000000e+00> : vector<64x16xf32>
    %54 = tpu.matmul %51, %53, %cst_21 {dimension_numbers = #tpu.dot_dimension_numbers<[1], [0], [0], [1], [0, 0, 1, 1], [], []>} : vector<64x3xf32>, vector<3x16xf32>, vector<64x16xf32> -> vector<64x16xf32>
    %55 = arith.addf %49, %54 : vector<64x16xf32>
    %56 = vector.extract_strided_slice %9 {offsets = [1, 0, 0], sizes = [8, 8, 3], strides = [1, 1, 1]} : vector<9x9x3xf32> to vector<8x8x3xf32>
    %57 = vector.shape_cast %56 : vector<8x8x3xf32> to vector<64x3xf32>
    %c6 = arith.constant 6 : index
    %c0_22 = arith.constant 0 : index
    %c0_23 = arith.constant 0 : index
    %58 = vector.load %arg2[%c6, %c0_22, %c0_23] : memref<9x3x16xf32, #tpu.memory_space<vmem>>, vector<1x3x16xf32>
    %59 = vector.shape_cast %58 : vector<1x3x16xf32> to vector<3x16xf32>
    %cst_24 = arith.constant dense<0.000000e+00> : vector<64x16xf32>
    %60 = tpu.matmul %57, %59, %cst_24 {dimension_numbers = #tpu.dot_dimension_numbers<[1], [0], [0], [1], [0, 0, 1, 1], [], []>} : vector<64x3xf32>, vector<3x16xf32>, vector<64x16xf32> -> vector<64x16xf32>
    %61 = arith.addf %55, %60 : vector<64x16xf32>
    %62 = vector.extract_strided_slice %12 {offsets = [1, 0, 0], sizes = [8, 8, 3], strides = [1, 1, 1]} : vector<9x9x3xf32> to vector<8x8x3xf32>
    %63 = vector.shape_cast %62 : vector<8x8x3xf32> to vector<64x3xf32>
    %c7 = arith.constant 7 : index
    %c0_25 = arith.constant 0 : index
    %c0_26 = arith.constant 0 : index
    %64 = vector.load %arg2[%c7, %c0_25, %c0_26] : memref<9x3x16xf32, #tpu.memory_space<vmem>>, vector<1x3x16xf32>
    %65 = vector.shape_cast %64 : vector<1x3x16xf32> to vector<3x16xf32>
    %cst_27 = arith.constant dense<0.000000e+00> : vector<64x16xf32>
    %66 = tpu.matmul %63, %65, %cst_27 {dimension_numbers = #tpu.dot_dimension_numbers<[1], [0], [0], [1], [0, 0, 1, 1], [], []>} : vector<64x3xf32>, vector<3x16xf32>, vector<64x16xf32> -> vector<64x16xf32>
    %67 = arith.addf %61, %66 : vector<64x16xf32>
    %68 = vector.extract_strided_slice %9 {offsets = [1, 1, 0], sizes = [8, 8, 3], strides = [1, 1, 1]} : vector<9x9x3xf32> to vector<8x8x3xf32>
    %69 = vector.shape_cast %68 : vector<8x8x3xf32> to vector<64x3xf32>
    %c8 = arith.constant 8 : index
    %c0_28 = arith.constant 0 : index
    %c0_29 = arith.constant 0 : index
    %70 = vector.load %arg2[%c8, %c0_28, %c0_29] : memref<9x3x16xf32, #tpu.memory_space<vmem>>, vector<1x3x16xf32>
    %71 = vector.shape_cast %70 : vector<1x3x16xf32> to vector<3x16xf32>
    %cst_30 = arith.constant dense<0.000000e+00> : vector<64x16xf32>
    %72 = tpu.matmul %69, %71, %cst_30 {dimension_numbers = #tpu.dot_dimension_numbers<[1], [0], [0], [1], [0, 0, 1, 1], [], []>} : vector<64x3xf32>, vector<3x16xf32>, vector<64x16xf32> -> vector<64x16xf32>
    %73 = arith.addf %67, %72 : vector<64x16xf32>
    %c0_31 = arith.constant 0 : index
    %c0_32 = arith.constant 0 : index
    %74 = vector.load %arg3[%c0_31, %c0_32] : memref<1x16xf32, #tpu.memory_space<vmem>>, vector<1x16xf32>
    %75 = vector.broadcast %74 : vector<1x16xf32> to vector<64x16xf32>
    %76 = arith.addf %73, %75 : vector<64x16xf32>
    %cst_33 = arith.constant 0.000000e+00 : f32
    %77 = vector.broadcast %cst_33 : f32 to vector<10x10x16xf32>
    %c0_34 = arith.constant 0 : index
    %c0_35 = arith.constant 0 : index
    %c0_36 = arith.constant 0 : index
    %78 = vector.load %arg7[%c0_34, %c0_35, %c0_36] : memref<10x10x16xf32, #tpu.memory_space<vmem>>, vector<10x10x16xf32>
    tpu.vector_store %arg7[%c0_34, %c0_35, %c0_36], %77 {strides = array<i32>} : memref<10x10x16xf32, #tpu.memory_space<vmem>>, vector<10x10x16xf32>,
    %79 = vector.shape_cast %76 : vector<64x16xf32> to vector<8x8x16xf32>
    %c1_37 = arith.constant 1 : index
    %c1_38 = arith.constant 1 : index
    %c0_39 = arith.constant 0 : index
    %80 = vector.load %arg7[%c1_37, %c1_38, %c0_39] : memref<10x10x16xf32, #tpu.memory_space<vmem>>, vector<8x8x16xf32>
    tpu.vector_store %arg7[%c1_37, %c1_38, %c0_39], %79 {strides = array<i32>} : memref<10x10x16xf32, #tpu.memory_space<vmem>>, vector<8x8x16xf32>,
    %c0_40 = arith.constant 0 : index
    %c0_41 = arith.constant 0 : index
    %c0_42 = arith.constant 0 : index
    %81 = vector.load %arg7[%c0_40, %c0_41, %c0_42] : memref<10x10x16xf32, #tpu.memory_space<vmem>>, vector<10x10x16xf32>
    %82 = vector.shape_cast %81 : vector<10x10x16xf32> to vector<10x5x2x16xf32>
    %83 = vector.extract_strided_slice %82 {offsets = [0, 0, 0, 0], sizes = [10, 5, 1, 16], strides = [1, 1, 1, 1]} : vector<10x5x2x16xf32> to vector<10x5x1x16xf32>
    %84 = vector.shape_cast %83 : vector<10x5x1x16xf32> to vector<10x5x16xf32>
    %85 = vector.extract_strided_slice %82 {offsets = [0, 0, 1, 0], sizes = [10, 5, 1, 16], strides = [1, 1, 1, 1]} : vector<10x5x2x16xf32> to vector<10x5x1x16xf32>
    %86 = vector.shape_cast %85 : vector<10x5x1x16xf32> to vector<10x5x16xf32>
    %87 = vector.shape_cast %84 : vector<10x5x16xf32> to vector<5x2x5x16xf32>
    %88 = vector.extract_strided_slice %87 {offsets = [0, 0, 0, 0], sizes = [5, 1, 5, 16], strides = [1, 1, 1, 1]} : vector<5x2x5x16xf32> to vector<5x1x5x16xf32>
    %89 = vector.shape_cast %88 : vector<5x1x5x16xf32> to vector<5x5x16xf32>
    %90 = vector.shape_cast %86 : vector<10x5x16xf32> to vector<5x2x5x16xf32>
    %91 = vector.extract_strided_slice %90 {offsets = [0, 0, 0, 0], sizes = [5, 1, 5, 16], strides = [1, 1, 1, 1]} : vector<5x2x5x16xf32> to vector<5x1x5x16xf32>
    %92 = vector.shape_cast %91 : vector<5x1x5x16xf32> to vector<5x5x16xf32>
    %93 = vector.shape_cast %84 : vector<10x5x16xf32> to vector<5x2x5x16xf32>
    %94 = vector.extract_strided_slice %93 {offsets = [0, 1, 0, 0], sizes = [5, 1, 5, 16], strides = [1, 1, 1, 1]} : vector<5x2x5x16xf32> to vector<5x1x5x16xf32>
    %95 = vector.shape_cast %94 : vector<5x1x5x16xf32> to vector<5x5x16xf32>
    %96 = vector.shape_cast %86 : vector<10x5x16xf32> to vector<5x2x5x16xf32>
    %97 = vector.extract_strided_slice %96 {offsets = [0, 1, 0, 0], sizes = [5, 1, 5, 16], strides = [1, 1, 1, 1]} : vector<5x2x5x16xf32> to vector<5x1x5x16xf32>
    %98 = vector.shape_cast %97 : vector<5x1x5x16xf32> to vector<5x5x16xf32>
    %cst_43 = arith.constant 0.000000e+00 : f32
    %99 = vector.broadcast %cst_43 : f32 to vector<16x32xf32>
    %100 = vector.extract_strided_slice %89 {offsets = [0, 0, 0], sizes = [4, 4, 16], strides = [1, 1, 1]} : vector<5x5x16xf32> to vector<4x4x16xf32>
    %101 = vector.shape_cast %100 : vector<4x4x16xf32> to vector<16x16xf32>
    %c0_44 = arith.constant 0 : index
    %c0_45 = arith.constant 0 : index
    %c0_46 = arith.constant 0 : index
    %102 = vector.load %arg4[%c0_44, %c0_45, %c0_46] : memref<9x16x32xf32, #tpu.memory_space<vmem>>, vector<1x16x32xf32>
    %103 = vector.shape_cast %102 : vector<1x16x32xf32> to vector<16x32xf32>
    %cst_47 = arith.constant dense<0.000000e+00> : vector<16x32xf32>
    %104 = tpu.matmul %101, %103, %cst_47 {dimension_numbers = #tpu.dot_dimension_numbers<[1], [0], [0], [1], [0, 0, 1, 1], [], []>} : vector<16x16xf32>, vector<16x32xf32>, vector<16x32xf32> -> vector<16x32xf32>
    %105 = arith.addf %99, %104 : vector<16x32xf32>
    %106 = vector.extract_strided_slice %92 {offsets = [0, 0, 0], sizes = [4, 4, 16], strides = [1, 1, 1]} : vector<5x5x16xf32> to vector<4x4x16xf32>
    %107 = vector.shape_cast %106 : vector<4x4x16xf32> to vector<16x16xf32>
    %c1_48 = arith.constant 1 : index
    %c0_49 = arith.constant 0 : index
    %c0_50 = arith.constant 0 : index
    %108 = vector.load %arg4[%c1_48, %c0_49, %c0_50] : memref<9x16x32xf32, #tpu.memory_space<vmem>>, vector<1x16x32xf32>
    %109 = vector.shape_cast %108 : vector<1x16x32xf32> to vector<16x32xf32>
    %cst_51 = arith.constant dense<0.000000e+00> : vector<16x32xf32>
    %110 = tpu.matmul %107, %109, %cst_51 {dimension_numbers = #tpu.dot_dimension_numbers<[1], [0], [0], [1], [0, 0, 1, 1], [], []>} : vector<16x16xf32>, vector<16x32xf32>, vector<16x32xf32> -> vector<16x32xf32>
    %111 = arith.addf %105, %110 : vector<16x32xf32>
    %112 = vector.extract_strided_slice %89 {offsets = [0, 1, 0], sizes = [4, 4, 16], strides = [1, 1, 1]} : vector<5x5x16xf32> to vector<4x4x16xf32>
    %113 = vector.shape_cast %112 : vector<4x4x16xf32> to vector<16x16xf32>
    %c2_52 = arith.constant 2 : index
    %c0_53 = arith.constant 0 : index
    %c0_54 = arith.constant 0 : index
    %114 = vector.load %arg4[%c2_52, %c0_53, %c0_54] : memref<9x16x32xf32, #tpu.memory_space<vmem>>, vector<1x16x32xf32>
    %115 = vector.shape_cast %114 : vector<1x16x32xf32> to vector<16x32xf32>
    %cst_55 = arith.constant dense<0.000000e+00> : vector<16x32xf32>
    %116 = tpu.matmul %113, %115, %cst_55 {dimension_numbers = #tpu.dot_dimension_numbers<[1], [0], [0], [1], [0, 0, 1, 1], [], []>} : vector<16x16xf32>, vector<16x32xf32>, vector<16x32xf32> -> vector<16x32xf32>
    %117 = arith.addf %111, %116 : vector<16x32xf32>
    %118 = vector.extract_strided_slice %95 {offsets = [0, 0, 0], sizes = [4, 4, 16], strides = [1, 1, 1]} : vector<5x5x16xf32> to vector<4x4x16xf32>
    %119 = vector.shape_cast %118 : vector<4x4x16xf32> to vector<16x16xf32>
    %c3_56 = arith.constant 3 : index
    %c0_57 = arith.constant 0 : index
    %c0_58 = arith.constant 0 : index
    %120 = vector.load %arg4[%c3_56, %c0_57, %c0_58] : memref<9x16x32xf32, #tpu.memory_space<vmem>>, vector<1x16x32xf32>
    %121 = vector.shape_cast %120 : vector<1x16x32xf32> to vector<16x32xf32>
    %cst_59 = arith.constant dense<0.000000e+00> : vector<16x32xf32>
    %122 = tpu.matmul %119, %121, %cst_59 {dimension_numbers = #tpu.dot_dimension_numbers<[1], [0], [0], [1], [0, 0, 1, 1], [], []>} : vector<16x16xf32>, vector<16x32xf32>, vector<16x32xf32> -> vector<16x32xf32>
    %123 = arith.addf %117, %122 : vector<16x32xf32>
    %124 = vector.extract_strided_slice %98 {offsets = [0, 0, 0], sizes = [4, 4, 16], strides = [1, 1, 1]} : vector<5x5x16xf32> to vector<4x4x16xf32>
    %125 = vector.shape_cast %124 : vector<4x4x16xf32> to vector<16x16xf32>
    %c4_60 = arith.constant 4 : index
    %c0_61 = arith.constant 0 : index
    %c0_62 = arith.constant 0 : index
    %126 = vector.load %arg4[%c4_60, %c0_61, %c0_62] : memref<9x16x32xf32, #tpu.memory_space<vmem>>, vector<1x16x32xf32>
    %127 = vector.shape_cast %126 : vector<1x16x32xf32> to vector<16x32xf32>
    %cst_63 = arith.constant dense<0.000000e+00> : vector<16x32xf32>
    %128 = tpu.matmul %125, %127, %cst_63 {dimension_numbers = #tpu.dot_dimension_numbers<[1], [0], [0], [1], [0, 0, 1, 1], [], []>} : vector<16x16xf32>, vector<16x32xf32>, vector<16x32xf32> -> vector<16x32xf32>
    %129 = arith.addf %123, %128 : vector<16x32xf32>
    %130 = vector.extract_strided_slice %95 {offsets = [0, 1, 0], sizes = [4, 4, 16], strides = [1, 1, 1]} : vector<5x5x16xf32> to vector<4x4x16xf32>
    %131 = vector.shape_cast %130 : vector<4x4x16xf32> to vector<16x16xf32>
    %c5_64 = arith.constant 5 : index
    %c0_65 = arith.constant 0 : index
    %c0_66 = arith.constant 0 : index
    %132 = vector.load %arg4[%c5_64, %c0_65, %c0_66] : memref<9x16x32xf32, #tpu.memory_space<vmem>>, vector<1x16x32xf32>
    %133 = vector.shape_cast %132 : vector<1x16x32xf32> to vector<16x32xf32>
    %cst_67 = arith.constant dense<0.000000e+00> : vector<16x32xf32>
    %134 = tpu.matmul %131, %133, %cst_67 {dimension_numbers = #tpu.dot_dimension_numbers<[1], [0], [0], [1], [0, 0, 1, 1], [], []>} : vector<16x16xf32>, vector<16x32xf32>, vector<16x32xf32> -> vector<16x32xf32>
    %135 = arith.addf %129, %134 : vector<16x32xf32>
    %136 = vector.extract_strided_slice %89 {offsets = [1, 0, 0], sizes = [4, 4, 16], strides = [1, 1, 1]} : vector<5x5x16xf32> to vector<4x4x16xf32>
    %137 = vector.shape_cast %136 : vector<4x4x16xf32> to vector<16x16xf32>
    %c6_68 = arith.constant 6 : index
    %c0_69 = arith.constant 0 : index
    %c0_70 = arith.constant 0 : index
    %138 = vector.load %arg4[%c6_68, %c0_69, %c0_70] : memref<9x16x32xf32, #tpu.memory_space<vmem>>, vector<1x16x32xf32>
    %139 = vector.shape_cast %138 : vector<1x16x32xf32> to vector<16x32xf32>
    %cst_71 = arith.constant dense<0.000000e+00> : vector<16x32xf32>
    %140 = tpu.matmul %137, %139, %cst_71 {dimension_numbers = #tpu.dot_dimension_numbers<[1], [0], [0], [1], [0, 0, 1, 1], [], []>} : vector<16x16xf32>, vector<16x32xf32>, vector<16x32xf32> -> vector<16x32xf32>
    %141 = arith.addf %135, %140 : vector<16x32xf32>
    %142 = vector.extract_strided_slice %92 {offsets = [1, 0, 0], sizes = [4, 4, 16], strides = [1, 1, 1]} : vector<5x5x16xf32> to vector<4x4x16xf32>
    %143 = vector.shape_cast %142 : vector<4x4x16xf32> to vector<16x16xf32>
    %c7_72 = arith.constant 7 : index
    %c0_73 = arith.constant 0 : index
    %c0_74 = arith.constant 0 : index
    %144 = vector.load %arg4[%c7_72, %c0_73, %c0_74] : memref<9x16x32xf32, #tpu.memory_space<vmem>>, vector<1x16x32xf32>
    %145 = vector.shape_cast %144 : vector<1x16x32xf32> to vector<16x32xf32>
    %cst_75 = arith.constant dense<0.000000e+00> : vector<16x32xf32>
    %146 = tpu.matmul %143, %145, %cst_75 {dimension_numbers = #tpu.dot_dimension_numbers<[1], [0], [0], [1], [0, 0, 1, 1], [], []>} : vector<16x16xf32>, vector<16x32xf32>, vector<16x32xf32> -> vector<16x32xf32>
    %147 = arith.addf %141, %146 : vector<16x32xf32>
    %148 = vector.extract_strided_slice %89 {offsets = [1, 1, 0], sizes = [4, 4, 16], strides = [1, 1, 1]} : vector<5x5x16xf32> to vector<4x4x16xf32>
    %149 = vector.shape_cast %148 : vector<4x4x16xf32> to vector<16x16xf32>
    %c8_76 = arith.constant 8 : index
    %c0_77 = arith.constant 0 : index
    %c0_78 = arith.constant 0 : index
    %150 = vector.load %arg4[%c8_76, %c0_77, %c0_78] : memref<9x16x32xf32, #tpu.memory_space<vmem>>, vector<1x16x32xf32>
    %151 = vector.shape_cast %150 : vector<1x16x32xf32> to vector<16x32xf32>
    %cst_79 = arith.constant dense<0.000000e+00> : vector<16x32xf32>
    %152 = tpu.matmul %149, %151, %cst_79 {dimension_numbers = #tpu.dot_dimension_numbers<[1], [0], [0], [1], [0, 0, 1, 1], [], []>} : vector<16x16xf32>, vector<16x32xf32>, vector<16x32xf32> -> vector<16x32xf32>
    %153 = arith.addf %147, %152 : vector<16x32xf32>
    %c0_80 = arith.constant 0 : index
    %c0_81 = arith.constant 0 : index
    %154 = vector.load %arg5[%c0_80, %c0_81] : memref<1x32xf32, #tpu.memory_space<vmem>>, vector<1x32xf32>
    %155 = vector.broadcast %154 : vector<1x32xf32> to vector<16x32xf32>
    %156 = arith.addf %153, %155 : vector<16x32xf32>
    %157 = tpu.transpose %156, [1, 0] : vector<16x32xf32> -> vector<32x16xf32>
    %c0_82 = arith.constant 0 : index
    %c0_83 = arith.constant 0 : index
    %c0_84 = arith.constant 0 : index
    %158 = vector.load %arg6[%c0_82, %c0_83, %c0_84] : memref<1x32x16xf32, #tpu.memory_space<vmem>>, vector<1x32x16xf32>
    %159 = vector.shape_cast %158 : vector<1x32x16xf32> to vector<32x16xf32>
    %160 = vector.shape_cast %157 : vector<32x16xf32> to vector<1x32x16xf32>
    tpu.vector_store %arg6[%c0_82, %c0_83, %c0_84], %160 {strides = array<i32>} : memref<1x32x16xf32, #tpu.memory_space<vmem>>, vector<1x32x16xf32>,
    return
  }
  func.func @transform_0(%arg0: i32) -> (i32, i32, i32, i32) {
    %c0_i32 = arith.constant 0 : i32
    %c0_i32_0 = arith.constant 0 : i32
    %c0_i32_1 = arith.constant 0 : i32
    %c0_i32_2 = arith.constant 0 : i32
    return %arg0, %c0_i32, %c0_i32_0, %c0_i32_1 : i32, i32, i32, i32
  }
  func.func @transform_1(%arg0: i32) -> (i32, i32, i32) {
    %c0_i32 = arith.constant 0 : i32
    %c0_i32_0 = arith.constant 0 : i32
    %c0_i32_1 = arith.constant 0 : i32
    %c0_i32_2 = arith.constant 0 : i32
    return %c0_i32, %c0_i32_0, %c0_i32_1 : i32, i32, i32
  }
  func.func @transform_2(%arg0: i32) -> (i32, i32) {
    %c0_i32 = arith.constant 0 : i32
    %c0_i32_0 = arith.constant 0 : i32
    %c0_i32_1 = arith.constant 0 : i32
    return %c0_i32, %c0_i32_0 : i32, i32
  }
  func.func @transform_3(%arg0: i32) -> (i32, i32, i32) {
    %c0_i32 = arith.constant 0 : i32
    %c0_i32_0 = arith.constant 0 : i32
    %c0_i32_1 = arith.constant 0 : i32
    %c0_i32_2 = arith.constant 0 : i32
    return %c0_i32, %c0_i32_0, %c0_i32_1 : i32, i32, i32
  }
  func.func @transform_4(%arg0: i32) -> (i32, i32) {
    %c0_i32 = arith.constant 0 : i32
    %c0_i32_0 = arith.constant 0 : i32
    %c0_i32_1 = arith.constant 0 : i32
    return %c0_i32, %c0_i32_0 : i32, i32
  }
  func.func @transform_5(%arg0: i32) -> (i32, i32, i32) {
    %c0_i32 = arith.constant 0 : i32
    %c0_i32_0 = arith.constant 0 : i32
    %c0_i32_1 = arith.constant 0 : i32
    return %arg0, %c0_i32, %c0_i32_0 : i32, i32, i32
  }
}

</mosaic_0001>

<llo_original>
// kernel: tpu_custom_call.1
$region0: #{tpu_custom_call.1}
  #allocation0 [shape = 'u32[]', space=smem, size = 0x4, offset = 0x4, fixed_abs, tag = 'smem constant byte address 0x4 - core index']
  #allocation1 [shape = 'u32[72,128]{1,0:T(1,128)}', space=vmem, size = 0x9000, scoped, tag = 'internal scratch']
  #allocation2 [shape = 'f32[10,10,16]{2,1,0:T(8,128)}', space=vmem, size = 0x14000, scoped, tag = 'scratch operand']
  %s0 = inlined_call_operand.vmem [shape: f32[2,18,18,3], index: 0, kind: input, shape index: {}]
  %s1 = inlined_call_operand.vmem [shape: f32[9,3,16], index: 1, kind: input, shape index: {}]
  %s2 = inlined_call_operand.vmem [shape: f32[1,16], index: 2, kind: input, shape index: {}]
  %s3 = inlined_call_operand.vmem [shape: f32[9,16,32], index: 3, kind: input, shape index: {}]
  %s4 = inlined_call_operand.vmem [shape: f32[1,32], index: 4, kind: input, shape index: {}]
  %s5 = inlined_call_operand.vmem [shape: f32[2,32,16], index: 5, kind: output, shape index: {}]
  %s6 = sld [smem:[#allocation0]]
  $region53: #{tpu_custom_call.1} parent=0
    _
  %s8 = ssub.s32 1, %s6
  %s9 = scalar_select 0, %s8, %s6
  loop: start=0, step=1, limit=4
  $region2: #{tpu_custom_call.1} parent=0 // loop_pre_header
    _
  $region3: #{tpu_custom_call.1} parent=0 // loop_header
    %s11 = sphi 0, %s15
    %p12 = scmp.ge.s32.totalorder %s11, 4
    %s21 = sphi 0, %s23
    %s24 = sphi 0, %s21
    %s25 = sphi 0, %s24
    %s41 = sphi 0, %s25
    %s45 = sphi 0, %s45
    %s47 = sphi 0, %s45
    %s48 = sphi 0, %s47
    %s62 = sphi 0, %s48
    %s66 = sphi 0, %s66
    %s68 = sphi 0, %s66
    %s69 = sphi 0, %s68
    %s83 = sphi 0, %s69
    %s87 = sphi 0, %s87
    %s89 = sphi 0, %s87
    %s90 = sphi 0, %s89
    %s104 = sphi 0, %s90
    %s108 = sphi 0, %s108
    %s110 = sphi 0, %s108
    %s111 = sphi 0, %s110
    %s125 = sphi 0, %s111
    %s131 = sphi 0, %s133
    %s134 = sphi 0, %s131
    %s135 = sphi 0, %s134
    %s151 = sphi 0, %s135
  $region4: #{tpu_custom_call.1} parent=0 // loop_header_branch
    %14 = sbr.rel (%p12) target = $region8
  $region5: #{tpu_custom_call.1} parent=0 // loop_body
    %s16 = ssub.s32 %s11, 1
    %s17 = ssub.s32 %s11, 2
    %s18 = sadd.s32 %s11, 1
    %s19 = ssub.s32 %s11, %s18
    %p20 = scmp.eq.s32.totalorder %s19, 0
    %s22 = sadd.s32 %s21, 1
    %s23 = scalar_select %p20, %s21, %s22
    %p26 = pneg %p20
    %p27 = scmp.eq.s32.totalorder %s11, 1
    %p28 = por %p26, %p27
    %p29 = scmp.ne.s32.totalorder %s21, %s24
    %p30 = scmp.eq.s32.totalorder %s11, 0
    %p31 = por %p29, %p30
    %p32 = scmp.ne.s32.totalorder %s21, %s24
    %p33 = scmp.eq.s32.totalorder %s16, 1
    %p34 = por %p32, %p33
    %p35 = scmp.ne.s32.totalorder %s24, %s25
    %p36 = scmp.eq.s32.totalorder %s16, 0
    %p37 = por %p35, %p36
    %p38 = scmp.ne.s32.totalorder %s24, %s25
    %p39 = scmp.eq.s32.totalorder %s17, 1
    %p40 = por %p38, %p39
    %p42 = scmp.ne.s32.totalorder %s25, %s41
    %p43 = scmp.eq.s32.totalorder %s17, 0
    %p44 = por %p42, %p43
    %s46 = sadd.s32 %s45, 1
    %p49 = scmp.eq.s32.totalorder %s11, 1
    %p50 = scmp.ne.s32.totalorder %s45, %s47
    %p51 = scmp.eq.s32.totalorder %s11, 0
    %p52 = por %p50, %p51
    %p53 = scmp.ne.s32.totalorder %s45, %s47
    %p54 = scmp.eq.s32.totalorder %s16, 1
    %p55 = por %p53, %p54
    %p56 = scmp.ne.s32.totalorder %s47, %s48
    %p57 = scmp.eq.s32.totalorder %s16, 0
    %p58 = por %p56, %p57
    %p59 = scmp.ne.s32.totalorder %s47, %s48
    %p60 = scmp.eq.s32.totalorder %s17, 1
    %p61 = por %p59, %p60
    %p63 = scmp.ne.s32.totalorder %s48, %s62
    %p64 = scmp.eq.s32.totalorder %s17, 0
    %p65 = por %p63, %p64
    %s67 = sadd.s32 %s66, 1
    %p70 = scmp.eq.s32.totalorder %s11, 1
    %p71 = scmp.ne.s32.totalorder %s66, %s68
    %p72 = scmp.eq.s32.totalorder %s11, 0
    %p73 = por %p71, %p72
    %p74 = scmp.ne.s32.totalorder %s66, %s68
    %p75 = scmp.eq.s32.totalorder %s16, 1
    %p76 = por %p74, %p75
    %p77 = scmp.ne.s32.totalorder %s68, %s69
    %p78 = scmp.eq.s32.totalorder %s16, 0
    %p79 = por %p77, %p78
    %p80 = scmp.ne.s32.totalorder %s68, %s69
    %p81 = scmp.eq.s32.totalorder %s17, 1
    %p82 = por %p80, %p81
    %p84 = scmp.ne.s32.totalorder %s69, %s83
    %p85 = scmp.eq.s32.totalorder %s17, 0
    %p86 = por %p84, %p85
    %s88 = sadd.s32 %s87, 1
    %p91 = scmp.eq.s32.totalorder %s11, 1
    %p92 = scmp.ne.s32.totalorder %s87, %s89
    %p93 = scmp.eq.s32.totalorder %s11, 0
    %p94 = por %p92, %p93
    %p95 = scmp.ne.s32.totalorder %s87, %s89
    %p96 = scmp.eq.s32.totalorder %s16, 1
    %p97 = por %p95, %p96
    %p98 = scmp.ne.s32.totalorder %s89, %s90
    %p99 = scmp.eq.s32.totalorder %s16, 0
    %p100 = por %p98, %p99
    %p101 = scmp.ne.s32.totalorder %s89, %s90
    %p102 = scmp.eq.s32.totalorder %s17, 1
    %p103 = por %p101, %p102
    %p105 = scmp.ne.s32.totalorder %s90, %s104
    %p106 = scmp.eq.s32.totalorder %s17, 0
    %p107 = por %p105, %p106
    %s109 = sadd.s32 %s108, 1
    %p112 = scmp.eq.s32.totalorder %s11, 1
    %p113 = scmp.ne.s32.totalorder %s108, %s110
    %p114 = scmp.eq.s32.totalorder %s11, 0
    %p115 = por %p113, %p114
    %p116 = scmp.ne.s32.totalorder %s108, %s110
    %p117 = scmp.eq.s32.totalorder %s16, 1
    %p118 = por %p116, %p117
    %p119 = scmp.ne.s32.totalorder %s110, %s111
    %p120 = scmp.eq.s32.totalorder %s16, 0
    %p121 = por %p119, %p120
    %p122 = scmp.ne.s32.totalorder %s110, %s111
    %p123 = scmp.eq.s32.totalorder %s17, 1
    %p124 = por %p122, %p123
    %p126 = scmp.ne.s32.totalorder %s111, %s125
    %p127 = scmp.eq.s32.totalorder %s17, 0
    %p128 = por %p126, %p127
    %s129 = ssub.s32 %s11, %s18
    %p130 = scmp.eq.s32.totalorder %s129, 0
    %s132 = sadd.s32 %s131, 1
    %s133 = scalar_select %p130, %s131, %s132
    %p136 = pneg %p130
    %p137 = scmp.eq.s32.totalorder %s11, 1
    %p138 = por %p136, %p137
    %p139 = scmp.ne.s32.totalorder %s131, %s134
    %p140 = scmp.eq.s32.totalorder %s11, 0
    %p141 = por %p139, %p140
    %p142 = scmp.ne.s32.totalorder %s131, %s134
    %p143 = scmp.eq.s32.totalorder %s16, 1
    %p144 = por %p142, %p143
    %p145 = scmp.ne.s32.totalorder %s134, %s135
    %p146 = scmp.eq.s32.totalorder %s16, 0
    %p147 = por %p145, %p146
    %p148 = scmp.ne.s32.totalorder %s134, %s135
    %p149 = scmp.eq.s32.totalorder %s17, 1
    %p150 = por %p148, %p149
    %p152 = scmp.ne.s32.totalorder %s135, %s151
    %p153 = scmp.eq.s32.totalorder %s17, 0
    %p154 = por %p152, %p153
    %p155 = scmp.le.s32.totalorder 1, %s11
    %p156 = scmp.lt.s32.totalorder %s11, 3
    %p157 = pnand %p155, %p156
    %p158 = pneg %p157
    // Predicated region
    $region9: #{tpu_custom_call.1} parent=5 // pred_check
      _
    $region10: #{tpu_custom_call.1} parent=5 // pred_check_branch
      %160 = sbr.rel (%p157) target = $region12
    $region11: #{tpu_custom_call.1} parent=5 // pred_region
      %s161 = ssub.s32 %s11, 1
      // Predicated region
      $region13: #{tpu_custom_call.1} parent=11 // pred_check
        %p162 = pneg %p58
      $region14: #{tpu_custom_call.1} parent=11 // pred_check_branch
        %164 = sbr.rel (%p162) target = $region16
      $region15: #{tpu_custom_call.1} parent=11 // pred_region
        _
      $region16: #{tpu_custom_call.1} parent=11 // pred_fallthru
        _
      // Predicated region
      $region17: #{tpu_custom_call.1} parent=11 // pred_check
        %p165 = pneg %p79
      $region18: #{tpu_custom_call.1} parent=11 // pred_check_branch
        %167 = sbr.rel (%p165) target = $region20
      $region19: #{tpu_custom_call.1} parent=11 // pred_region
        _
      $region20: #{tpu_custom_call.1} parent=11 // pred_fallthru
        _
      // Predicated region
      $region21: #{tpu_custom_call.1} parent=11 // pred_check
        %p168 = pneg %p100
      $region22: #{tpu_custom_call.1} parent=11 // pred_check_branch
        %170 = sbr.rel (%p168) target = $region24
      $region23: #{tpu_custom_call.1} parent=11 // pred_region
        _
      $region24: #{tpu_custom_call.1} parent=11 // pred_fallthru
        _
      // Predicated region
      $region25: #{tpu_custom_call.1} parent=11 // pred_check
        %p171 = pneg %p121
      $region26: #{tpu_custom_call.1} parent=11 // pred_check_branch
        %173 = sbr.rel (%p171) target = $region28
      $region27: #{tpu_custom_call.1} parent=11 // pred_region
        _
      $region28: #{tpu_custom_call.1} parent=11 // pred_fallthru
        _
    $region12: #{tpu_custom_call.1} parent=5 // pred_fallthru
      _
    %p174 = scmp.lt.s32.totalorder %s11, 2
    // Predicated region
    $region29: #{tpu_custom_call.1} parent=5 // pred_check
      %p175 = pneg %p174
    $region30: #{tpu_custom_call.1} parent=5 // pred_check_branch
      %177 = sbr.rel (%p175) target = $region32
    $region31: #{tpu_custom_call.1} parent=5 // pred_region
      // Predicated region
      $region33: #{tpu_custom_call.1} parent=31 // pred_check
        %p178 = pneg %p31
      $region34: #{tpu_custom_call.1} parent=31 // pred_check_branch
        %180 = sbr.rel (%p178) target = $region36
      $region35: #{tpu_custom_call.1} parent=31 // pred_region
        %p181 = scmp.lt.s32.totalorder %s11, 1
        %s182 = scalar_select %p181, %s11, 1
        %s183 = smul.addr %s182, 54
        %s184 = smul.addr %s183, 8
        %s185 = scalar_lea.vmem %s0, %s184
      $region36: #{tpu_custom_call.1} parent=31 // pred_fallthru
        _
    $region32: #{tpu_custom_call.1} parent=5 // pred_fallthru
      _
    %p186 = scmp.le.s32.totalorder 1, %s11
    %p187 = scmp.lt.s32.totalorder %s11, 3
    %p188 = pnand %p186, %p187
    %p189 = pneg %p188
    // Predicated region
    $region37: #{tpu_custom_call.1} parent=5 // pred_check
      _
    $region38: #{tpu_custom_call.1} parent=5 // pred_check_branch
      %191 = sbr.rel (%p188) target = $region40
    $region39: #{tpu_custom_call.1} parent=5 // pred_region
      %s192 = ssub.s32 %s11, 1
      %p193 = scmp.lt.s32.totalorder %s16, 1
      %s194 = scalar_select %p193, %s16, 1
      %s195 = smul.addr %s194, 54
      %s196 = smul.addr %s195, 8
      %s197 = scalar_lea.vmem %s0, %s196
      %p198 = pneg %p37
      %p199 = pneg %p34
      %p200 = pneg %p58
      %p201 = pneg %p55
      %p202 = pneg %p79
      %p203 = pneg %p76
      %p204 = pneg %p100
      %p205 = pneg %p97
      %p206 = pneg %p121
      %p207 = pneg %p118
      %p208 = pneg %p147
      %p209 = pneg %p144
      %p210 = scmp.lt.s32.totalorder %s16, 1
      %s211 = scalar_select %p210, %s16, 1
      %s212 = smul.addr %s211, 4
      %s213 = smul.addr %s212, 8
      %s214 = scalar_lea.vmem %s5, %s213
      %p215 = scmp.lt.s32.totalorder %s16, 1
      %s216 = scalar_select %p215, %s16, 1
      %s217 = smul.addr %s216, 54
      %s218 = smul.addr %s217, 8
      %s219 = scalar_lea.vmem %s0, %s218
      %p220 = scmp.lt.s32.totalorder %s16, 1
      %s221 = scalar_select %p220, %s16, 1
      %s222 = smul.addr %s221, 4
      %s223 = smul.addr %s222, 8
      %s224 = scalar_lea.vmem %s5, %s223
      %v225 = vld [vmem:[%s219] sm:$0xff]
      %v226 = vld [vmem:[%s219 + $0x8] sm:$0xff]
      %v227 = vld [vmem:[%s219 + $0x10] sm:$0x3]
      %v228 = vld [vmem:[%s219 + $0x18] sm:$0xff]
      %v229 = vld [vmem:[%s219 + $0x20] sm:$0xff]
      %v230 = vld [vmem:[%s219 + $0x28] sm:$0x3]
      %v231 = vld [vmem:[%s219 + $0x30] sm:$0xff]
      %v232 = vld [vmem:[%s219 + $0x38] sm:$0xff]
      %v233 = vld [vmem:[%s219 + $0x40] sm:$0x3]
      %v234 = vld [vmem:[%s219 + $0x48] sm:$0xff]
      %v235 = vld [vmem:[%s219 + $0x50] sm:$0xff]
      %v236 = vld [vmem:[%s219 + $0x58] sm:$0x3]
      %v237 = vld [vmem:[%s219 + $0x60] sm:$0xff]
      %v238 = vld [vmem:[%s219 + $0x68] sm:$0xff]
      %v239 = vld [vmem:[%s219 + $0x70] sm:$0x3]
      %v240 = vld [vmem:[%s219 + $0x78] sm:$0xff]
      %v241 = vld [vmem:[%s219 + $0x80] sm:$0xff]
      %v242 = vld [vmem:[%s219 + $0x88] sm:$0x3]
      %v243 = vld [vmem:[%s219 + $0x90] sm:$0xff]
      %v244 = vld [vmem:[%s219 + $0x98] sm:$0xff]
      %v245 = vld [vmem:[%s219 + $0xa0] sm:$0x3]
      %v246 = vld [vmem:[%s219 + $0xa8] sm:$0xff]
      %v247 = vld [vmem:[%s219 + $0xb0] sm:$0xff]
      %v248 = vld [vmem:[%s219 + $0xb8] sm:$0x3]
      %v249 = vld [vmem:[%s219 + $0xc0] sm:$0xff]
      %v250 = vld [vmem:[%s219 + $0xc8] sm:$0xff]
      %v251 = vld [vmem:[%s219 + $0xd0] sm:$0x3]
      %v252 = vld [vmem:[%s219 + $0xd8] sm:$0xff]
      %v253 = vld [vmem:[%s219 + $0xe0] sm:$0xff]
      %v254 = vld [vmem:[%s219 + $0xe8] sm:$0x3]
      %v255 = vld [vmem:[%s219 + $0xf0] sm:$0xff]
      %v256 = vld [vmem:[%s219 + $0xf8] sm:$0xff]
      %v257 = vld [vmem:[%s219 + $0x100] sm:$0x3]
      %v258 = vld [vmem:[%s219 + $0x108] sm:$0xff]
      %v259 = vld [vmem:[%s219 + $0x110] sm:$0xff]
      %v260 = vld [vmem:[%s219 + $0x118] sm:$0x3]
      %v261 = vld [vmem:[%s219 + $0x120] sm:$0xff]
      %v262 = vld [vmem:[%s219 + $0x128] sm:$0xff]
      %v263 = vld [vmem:[%s219 + $0x130] sm:$0x3]
      %v264 = vld [vmem:[%s219 + $0x138] sm:$0xff]
      %v265 = vld [vmem:[%s219 + $0x140] sm:$0xff]
      %v266 = vld [vmem:[%s219 + $0x148] sm:$0x3]
      %v267 = vld [vmem:[%s219 + $0x150] sm:$0xff]
      %v268 = vld [vmem:[%s219 + $0x158] sm:$0xff]
      %v269 = vld [vmem:[%s219 + $0x160] sm:$0x3]
      %v270 = vld [vmem:[%s219 + $0x168] sm:$0xff]
      %v271 = vld [vmem:[%s219 + $0x170] sm:$0xff]
      %v272 = vld [vmem:[%s219 + $0x178] sm:$0x3]
      %v273 = vld [vmem:[%s219 + $0x180] sm:$0xff]
      %v274 = vld [vmem:[%s219 + $0x188] sm:$0xff]
      %v275 = vld [vmem:[%s219 + $0x190] sm:$0x3]
      %v327 = vrot.slane %v225, 2
      %v328 = vrot.slane %v225, 4
      %v329 = vrot.slane %v225, 6
      %v330 = vrot.slane %v226, 2
      %v331 = vrot.slane %v226, 4
      %v332 = vrot.slane %v226, 6
      %v333 = vrot.slane %v228, 2
      %v334 = vrot.slane %v228, 4
      %v335 = vrot.slane %v228, 6
      %v336 = vrot.slane %v229, 2
      %v337 = vrot.slane %v229, 4
      %v338 = vrot.slane %v229, 6
      %v339 = vrot.slane %v231, 2
      %v340 = vrot.slane %v231, 4
      %v341 = vrot.slane %v231, 6
      %v342 = vrot.slane %v232, 2
      %v343 = vrot.slane %v232, 4
      %v344 = vrot.slane %v232, 6
      %v345 = vrot.slane %v234, 2
      %v346 = vrot.slane %v234, 4
      %v347 = vrot.slane %v234, 6
      %v348 = vrot.slane %v235, 2
      %v349 = vrot.slane %v235, 4
      %v350 = vrot.slane %v235, 6
      %v351 = vrot.slane %v237, 2
      %v352 = vrot.slane %v237, 4
      %v353 = vrot.slane %v237, 6
      %v354 = vrot.slane %v238, 2
      %v355 = vrot.slane %v238, 4
      %v356 = vrot.slane %v238, 6
      %v357 = vrot.slane %v240, 2
      %v358 = vrot.slane %v240, 4
      %v359 = vrot.slane %v240, 6
      %v360 = vrot.slane %v241, 2
      %v361 = vrot.slane %v241, 4
      %v362 = vrot.slane %v241, 6
      %v363 = vrot.slane %v243, 2
      %v364 = vrot.slane %v243, 4
      %v365 = vrot.slane %v243, 6
      %v366 = vrot.slane %v244, 2
      %v367 = vrot.slane %v244, 4
      %v368 = vrot.slane %v244, 6
      %v369 = vrot.slane %v246, 2
      %v370 = vrot.slane %v246, 4
      %v371 = vrot.slane %v246, 6
      %v372 = vrot.slane %v247, 2
      %v373 = vrot.slane %v247, 4
      %v374 = vrot.slane %v247, 6
      %v375 = vrot.slane %v249, 2
      %v376 = vrot.slane %v249, 4
      %v377 = vrot.slane %v249, 6
      %v378 = vrot.slane %v250, 2
      %v379 = vrot.slane %v250, 4
      %v380 = vrot.slane %v250, 6
      %v381 = vrot.slane %v252, 2
      %v382 = vrot.slane %v252, 4
      %v383 = vrot.slane %v252, 6
      %v384 = vrot.slane %v253, 2
      %v385 = vrot.slane %v253, 4
      %v386 = vrot.slane %v253, 6
      %v387 = vrot.slane %v255, 2
      %v388 = vrot.slane %v255, 4
      %v389 = vrot.slane %v255, 6
      %v390 = vrot.slane %v256, 2
      %v391 = vrot.slane %v256, 4
      %v392 = vrot.slane %v256, 6
      %v393 = vrot.slane %v258, 2
      %v394 = vrot.slane %v258, 4
      %v395 = vrot.slane %v258, 6
      %v396 = vrot.slane %v259, 2
      %v397 = vrot.slane %v259, 4
      %v398 = vrot.slane %v259, 6
      %v399 = vrot.slane %v261, 2
      %v400 = vrot.slane %v261, 4
      %v401 = vrot.slane %v261, 6
      %v402 = vrot.slane %v262, 2
      %v403 = vrot.slane %v262, 4
      %v404 = vrot.slane %v262, 6
      %v405 = vrot.slane %v264, 2
      %v406 = vrot.slane %v264, 4
      %v407 = vrot.slane %v264, 6
      %v408 = vrot.slane %v265, 2
      %v409 = vrot.slane %v265, 4
      %v410 = vrot.slane %v265, 6
      %v411 = vrot.slane %v267, 2
      %v412 = vrot.slane %v267, 4
      %v413 = vrot.slane %v267, 6
      %v414 = vrot.slane %v268, 2
      %v415 = vrot.slane %v268, 4
      %v416 = vrot.slane %v268, 6
      %v417 = vrot.slane %v270, 2
      %v418 = vrot.slane %v270, 4
      %v419 = vrot.slane %v270, 6
      %v420 = vrot.slane %v271, 2
      %v421 = vrot.slane %v271, 4
      %v422 = vrot.slane %v271, 6
      %v423 = vrot.slane %v273, 2
      %v424 = vrot.slane %v273, 4
      %v425 = vrot.slane %v273, 6
      %v426 = vrot.slane %v274, 2
      %v427 = vrot.slane %v274, 4
      %v428 = vrot.slane %v274, 6
      %v429 = vld [vmem:[%s1] sm:$0x7]
      %s430 = scalar_lea.vmem %s1, 4
      %v431 = vld [vmem:[%s430] sm:$0x7]
      %v432 = vperm.slane %v225, 1
      %v433 = vperm.slane %v327, 1
      %v434 = vperm.slane %v328, 1
      %v435 = vperm.slane %v329, 1
      %v436 = vperm.slane %v226, 1
      %v437 = vperm.slane %v330, 1
      %v438 = vperm.slane %v331, 1
      %v439 = vperm.slane %v332, 1
      %v440 = vperm.slane %v231, 1
      %v441 = vperm.slane %v339, 1
      %v442 = vperm.slane %v340, 1
      %v443 = vperm.slane %v341, 1
      %v444 = vperm.slane %v232, 1
      %v445 = vperm.slane %v342, 1
      %v446 = vperm.slane %v343, 1
      %v447 = vperm.slane %v344, 1
      %v448 = vperm.slane %v237, 1
      %v449 = vperm.slane %v351, 1
      %v450 = vperm.slane %v352, 1
      %v451 = vperm.slane %v353, 1
      %v452 = vperm.slane %v238, 1
      %v453 = vperm.slane %v354, 1
      %v454 = vperm.slane %v355, 1
      %v455 = vperm.slane %v356, 1
      %v456 = vperm.slane %v243, 1
      %v457 = vperm.slane %v363, 1
      %v458 = vperm.slane %v364, 1
      %v459 = vperm.slane %v365, 1
      %v460 = vperm.slane %v244, 1
      %v461 = vperm.slane %v366, 1
      %v462 = vperm.slane %v367, 1
      %v463 = vperm.slane %v368, 1
      %v464 = vperm.slane %v249, 1
      %v465 = vperm.slane %v375, 1
      %v466 = vperm.slane %v376, 1
      %v467 = vperm.slane %v377, 1
      %v468 = vperm.slane %v250, 1
      %v469 = vperm.slane %v378, 1
      %v470 = vperm.slane %v379, 1
      %v471 = vperm.slane %v380, 1
      %v472 = vperm.slane %v255, 1
      %v473 = vperm.slane %v387, 1
      %v474 = vperm.slane %v388, 1
      %v475 = vperm.slane %v389, 1
      %v476 = vperm.slane %v256, 1
      %v477 = vperm.slane %v390, 1
      %v478 = vperm.slane %v391, 1
      %v479 = vperm.slane %v392, 1
      %v480 = vperm.slane %v261, 1
      %v481 = vperm.slane %v399, 1
      %v482 = vperm.slane %v400, 1
      %v483 = vperm.slane %v401, 1
      %v484 = vperm.slane %v262, 1
      %v485 = vperm.slane %v402, 1
      %v486 = vperm.slane %v403, 1
      %v487 = vperm.slane %v404, 1
      %v488 = vperm.slane %v267, 1
      %v489 = vperm.slane %v411, 1
      %v490 = vperm.slane %v412, 1
      %v491 = vperm.slane %v413, 1
      %v492 = vperm.slane %v268, 1
      %v493 = vperm.slane %v414, 1
      %v494 = vperm.slane %v415, 1
      %v495 = vperm.slane %v416, 1
      %vm496 = vcmask 1041409
      %v497 = vsel %vm496, %v433, %v432
      %vm498 = vcmask 1042434
      %v499 = vsel %vm498, %v434, %v497
      %vm500 = vcmask 1043459
      %v501 = vsel %vm500, %v435, %v499
      %vm502 = vcmask 1044484
      %v503 = vsel %vm502, %v436, %v501
      %vm504 = vcmask 1045509
      %v505 = vsel %vm504, %v437, %v503
      %vm506 = vcmask 1046534
      %v507 = vsel %vm506, %v438, %v505
      %vm508 = vcmask 1047559
      %v509 = vsel %vm508, %v439, %v507
      %v510 = vsel %vm496, %v441, %v440
      %v511 = vsel %vm498, %v442, %v510
      %v512 = vsel %vm500, %v443, %v511
      %v513 = vsel %vm502, %v444, %v512
      %v514 = vsel %vm504, %v445, %v513
      %v515 = vsel %vm506, %v446, %v514
      %v516 = vsel %vm508, %v447, %v515
      %v517 = vsel %vm496, %v449, %v448
      %v518 = vsel %vm498, %v450, %v517
      %v519 = vsel %vm500, %v451, %v518
      %v520 = vsel %vm502, %v452, %v519
      %v521 = vsel %vm504, %v453, %v520
      %v522 = vsel %vm506, %v454, %v521
      %v523 = vsel %vm508, %v455, %v522
      %v524 = vsel %vm496, %v457, %v456
      %v525 = vsel %vm498, %v458, %v524
      %v526 = vsel %vm500, %v459, %v525
      %v527 = vsel %vm502, %v460, %v526
      %v528 = vsel %vm504, %v461, %v527
      %v529 = vsel %vm506, %v462, %v528
      %v530 = vsel %vm508, %v463, %v529
      %v531 = vsel %vm496, %v465, %v464
      %v532 = vsel %vm498, %v466, %v531
      %v533 = vsel %vm500, %v467, %v532
      %v534 = vsel %vm502, %v468, %v533
      %v535 = vsel %vm504, %v469, %v534
      %v536 = vsel %vm506, %v470, %v535
      %v537 = vsel %vm508, %v471, %v536
      %v538 = vsel %vm496, %v473, %v472
      %v539 = vsel %vm498, %v474, %v538
      %v540 = vsel %vm500, %v475, %v539
      %v541 = vsel %vm502, %v476, %v540
      %v542 = vsel %vm504, %v477, %v541
      %v543 = vsel %vm506, %v478, %v542
      %v544 = vsel %vm508, %v479, %v543
      %v545 = vsel %vm496, %v481, %v480
      %v546 = vsel %vm498, %v482, %v545
      %v547 = vsel %vm500, %v483, %v546
      %v548 = vsel %vm502, %v484, %v547
      %v549 = vsel %vm504, %v485, %v548
      %v550 = vsel %vm506, %v486, %v549
      %v551 = vsel %vm508, %v487, %v550
      %v552 = vsel %vm496, %v489, %v488
      %v553 = vsel %vm498, %v490, %v552
      %v554 = vsel %vm500, %v491, %v553
      %v555 = vsel %vm502, %v492, %v554
      %v556 = vsel %vm504, %v493, %v555
      %v557 = vsel %vm506, %v494, %v556
      %v558 = vsel %vm508, %v495, %v557
      %vm559 = vcmask 23552
      %v560 = vsel %vm559, %v509, 0
      %v562 = vsel %vm559, %v516, 0
      %v564 = vsel %vm559, %v523, 0
      %v566 = vsel %vm559, %v530, 0
      %v568 = vsel %vm559, %v537, 0
      %v570 = vsel %vm559, %v544, 0
      %v572 = vsel %vm559, %v551, 0
      %v574 = vsel %vm559, %v558, 0
      %vm576 = vcmask 1042432
      %v578 = vsel %vm576, %v431, 0
      %580 = vmatpush.msra.mxu0 0.0
      %581 = vmatpush.msra.mxu0 0.0
      %582 = vmatpush.msra.mxu0 0.0
      %583 = vmatpush.msra.mxu0 0.0
      %584 = vmatpush.msra.mxu0 0.0
      %585 = vmatpush.msra.mxu0 0.0
      %586 = vmatpush.msra.mxu0 0.0
      %587 = vmatpush.msra.mxu0 0.0
      %588 = vmatpush.msra.mxu0 0.0
      %589 = vmatpush.msra.mxu0 0.0
      %590 = vmatpush.msra.mxu0 0.0
      %591 = vmatpush.msra.mxu0 0.0
      %592 = vmatpush.msra.mxu0 0.0
      %593 = vmatpush.msra.mxu0 0.0
      %594 = vmatpush.msra.mxu0 0.0
      %595 = vmatpush.msra.mxu0 %v578
      %596 = vmatmul.f32.gmra.mxu0 %v560
      %v597 = vpop.f32.mrf.mxu0
      %v598 = vadd.f32 0.0, %v597
      %599 = vmatmul.f32.gmra.mxu0 %v562
      %v600 = vpop.f32.mrf.mxu0
      %v601 = vadd.f32 0.0, %v600
      %602 = vmatmul.f32.gmra.mxu0 %v564
      %v603 = vpop.f32.mrf.mxu0
      %v604 = vadd.f32 0.0, %v603
      %605 = vmatmul.f32.gmra.mxu0 %v566
      %v606 = vpop.f32.mrf.mxu0
      %v607 = vadd.f32 0.0, %v606
      %608 = vmatmul.f32.gmra.mxu0 %v568
      %v609 = vpop.f32.mrf.mxu0
      %v610 = vadd.f32 0.0, %v609
      %611 = vmatmul.f32.gmra.mxu0 %v570
      %v612 = vpop.f32.mrf.mxu0
      %v613 = vadd.f32 0.0, %v612
      %614 = vmatmul.f32.gmra.mxu0 %v572
      %v615 = vpop.f32.mrf.mxu0
      %v616 = vadd.f32 0.0, %v615
      %617 = vmatmul.f32.gmra.mxu0 %v574
      %v618 = vpop.f32.mrf.mxu0
      %v619 = vadd.f32 0.0, %v618
      %620 = vdwg.mxu0
      %v621 = vperm.slane %v225, 0
      %v622 = vperm.slane %v327, 0
      %v623 = vperm.slane %v328, 0
      %v624 = vperm.slane %v329, 0
      %v625 = vperm.slane %v226, 0
      %v626 = vperm.slane %v330, 0
      %v627 = vperm.slane %v331, 0
      %v628 = vperm.slane %v332, 0
      %v629 = vperm.slane %v231, 0
      %v630 = vperm.slane %v339, 0
      %v631 = vperm.slane %v340, 0
      %v632 = vperm.slane %v341, 0
      %v633 = vperm.slane %v232, 0
      %v634 = vperm.slane %v342, 0
      %v635 = vperm.slane %v343, 0
      %v636 = vperm.slane %v344, 0
      %v637 = vperm.slane %v237, 0
      %v638 = vperm.slane %v351, 0
      %v639 = vperm.slane %v352, 0
      %v640 = vperm.slane %v353, 0
      %v641 = vperm.slane %v238, 0
      %v642 = vperm.slane %v354, 0
      %v643 = vperm.slane %v355, 0
      %v644 = vperm.slane %v356, 0
      %v645 = vperm.slane %v243, 0
      %v646 = vperm.slane %v363, 0
      %v647 = vperm.slane %v364, 0
      %v648 = vperm.slane %v365, 0
      %v649 = vperm.slane %v244, 0
      %v650 = vperm.slane %v366, 0
      %v651 = vperm.slane %v367, 0
      %v652 = vperm.slane %v368, 0
      %v653 = vperm.slane %v249, 0
      %v654 = vperm.slane %v375, 0
      %v655 = vperm.slane %v376, 0
      %v656 = vperm.slane %v377, 0
      %v657 = vperm.slane %v250, 0
      %v658 = vperm.slane %v378, 0
      %v659 = vperm.slane %v379, 0
      %v660 = vperm.slane %v380, 0
      %v661 = vperm.slane %v255, 0
      %v662 = vperm.slane %v387, 0
      %v663 = vperm.slane %v388, 0
      %v664 = vperm.slane %v389, 0
      %v665 = vperm.slane %v256, 0
      %v666 = vperm.slane %v390, 0
      %v667 = vperm.slane %v391, 0
      %v668 = vperm.slane %v392, 0
      %v669 = vperm.slane %v261, 0
      %v670 = vperm.slane %v399, 0
      %v671 = vperm.slane %v400, 0
      %v672 = vperm.slane %v401, 0
      %v673 = vperm.slane %v262, 0
      %v674 = vperm.slane %v402, 0
      %v675 = vperm.slane %v403, 0
      %v676 = vperm.slane %v404, 0
      %v677 = vperm.slane %v267, 0
      %v678 = vperm.slane %v411, 0
      %v679 = vperm.slane %v412, 0
      %v680 = vperm.slane %v413, 0
      %v681 = vperm.slane %v268, 0
      %v682 = vperm.slane %v414, 0
      %v683 = vperm.slane %v415, 0
      %v684 = vperm.slane %v416, 0
      %v685 = vsel %vm496, %v622, %v621
      %v686 = vsel %vm498, %v623, %v685
      %v687 = vsel %vm500, %v624, %v686
      %v688 = vsel %vm502, %v625, %v687
      %v689 = vsel %vm504, %v626, %v688
      %v690 = vsel %vm506, %v627, %v689
      %v691 = vsel %vm508, %v628, %v690
      %v692 = vsel %vm496, %v630, %v629
      %v693 = vsel %vm498, %v631, %v692
      %v694 = vsel %vm500, %v632, %v693
      %v695 = vsel %vm502, %v633, %v694
      %v696 = vsel %vm504, %v634, %v695
      %v697 = vsel %vm506, %v635, %v696
      %v698 = vsel %vm508, %v636, %v697
      %v699 = vsel %vm496, %v638, %v637
      %v700 = vsel %vm498, %v639, %v699
      %v701 = vsel %vm500, %v640, %v700
      %v702 = vsel %vm502, %v641, %v701
      %v703 = vsel %vm504, %v642, %v702
      %v704 = vsel %vm506, %v643, %v703
      %v705 = vsel %vm508, %v644, %v704
      %v706 = vsel %vm496, %v646, %v645
      %v707 = vsel %vm498, %v647, %v706
      %v708 = vsel %vm500, %v648, %v707
      %v709 = vsel %vm502, %v649, %v708
      %v710 = vsel %vm504, %v650, %v709
      %v711 = vsel %vm506, %v651, %v710
      %v712 = vsel %vm508, %v652, %v711
      %v713 = vsel %vm496, %v654, %v653
      %v714 = vsel %vm498, %v655, %v713
      %v715 = vsel %vm500, %v656, %v714
      %v716 = vsel %vm502, %v657, %v715
      %v717 = vsel %vm504, %v658, %v716
      %v718 = vsel %vm506, %v659, %v717
      %v719 = vsel %vm508, %v660, %v718
      %v720 = vsel %vm496, %v662, %v661
      %v721 = vsel %vm498, %v663, %v720
      %v722 = vsel %vm500, %v664, %v721
      %v723 = vsel %vm502, %v665, %v722
      %v724 = vsel %vm504, %v666, %v723
      %v725 = vsel %vm506, %v667, %v724
      %v726 = vsel %vm508, %v668, %v725
      %v727 = vsel %vm496, %v670, %v669
      %v728 = vsel %vm498, %v671, %v727
      %v729 = vsel %vm500, %v672, %v728
      %v730 = vsel %vm502, %v673, %v729
      %v731 = vsel %vm504, %v674, %v730
      %v732 = vsel %vm506, %v675, %v731
      %v733 = vsel %vm508, %v676, %v732
      %v734 = vsel %vm496, %v678, %v677
      %v735 = vsel %vm498, %v679, %v734
      %v736 = vsel %vm500, %v680, %v735
      %v737 = vsel %vm502, %v681, %v736
      %v738 = vsel %vm504, %v682, %v737
      %v739 = vsel %vm506, %v683, %v738
      %v740 = vsel %vm508, %v684, %v739
      %v741 = vsel %vm559, %v691, 0
      %v743 = vsel %vm559, %v698, 0
      %v745 = vsel %vm559, %v705, 0
      %v747 = vsel %vm559, %v712, 0
      %v749 = vsel %vm559, %v719, 0
      %v751 = vsel %vm559, %v726, 0
      %v753 = vsel %vm559, %v733, 0
      %v755 = vsel %vm559, %v740, 0
      %v758 = vsel %vm576, %v429, 0
      %760 = vmatpush.msra.mxu0 0.0
      %761 = vmatpush.msra.mxu0 0.0
      %762 = vmatpush.msra.mxu0 0.0
      %763 = vmatpush.msra.mxu0 0.0
      %764 = vmatpush.msra.mxu0 0.0
      %765 = vmatpush.msra.mxu0 0.0
      %766 = vmatpush.msra.mxu0 0.0
      %767 = vmatpush.msra.mxu0 0.0
      %768 = vmatpush.msra.mxu0 0.0
      %769 = vmatpush.msra.mxu0 0.0
      %770 = vmatpush.msra.mxu0 0.0
      %771 = vmatpush.msra.mxu0 0.0
      %772 = vmatpush.msra.mxu0 0.0
      %773 = vmatpush.msra.mxu0 0.0
      %774 = vmatpush.msra.mxu0 0.0
      %775 = vmatpush.msra.mxu0 %v758
      %776 = vmatmul.f32.gmra.mxu0 %v741
      %v777 = vpop.f32.mrf.mxu0
      %v778 = vadd.f32 %v598, %v777
      %779 = vmatmul.f32.gmra.mxu0 %v743
      %v780 = vpop.f32.mrf.mxu0
      %v781 = vadd.f32 %v601, %v780
      %782 = vmatmul.f32.gmra.mxu0 %v745
      %v783 = vpop.f32.mrf.mxu0
      %v784 = vadd.f32 %v604, %v783
      %785 = vmatmul.f32.gmra.mxu0 %v747
      %v786 = vpop.f32.mrf.mxu0
      %v787 = vadd.f32 %v607, %v786
      %788 = vmatmul.f32.gmra.mxu0 %v749
      %v789 = vpop.f32.mrf.mxu0
      %v790 = vadd.f32 %v610, %v789
      %791 = vmatmul.f32.gmra.mxu0 %v751
      %v792 = vpop.f32.mrf.mxu0
      %v793 = vadd.f32 %v613, %v792
      %794 = vmatmul.f32.gmra.mxu0 %v753
      %v795 = vpop.f32.mrf.mxu0
      %v796 = vadd.f32 %v616, %v795
      %797 = vmatmul.f32.gmra.mxu0 %v755
      %v798 = vpop.f32.mrf.mxu0
      %v799 = vadd.f32 %v619, %v798
      %800 = vdwg.mxu0
      %s801 = scalar_lea.vmem %s1, 8
      %v802 = vld [vmem:[%s801] sm:$0x7]
      %v803 = vperm.slane %v227, 0
      %v804 = vperm.slane %v233, 0
      %v805 = vperm.slane %v239, 0
      %v806 = vperm.slane %v245, 0
      %v807 = vperm.slane %v251, 0
      %v808 = vperm.slane %v257, 0
      %v809 = vperm.slane %v263, 0
      %v810 = vperm.slane %v269, 0
      %v811 = vsel %vm496, %v623, %v622
      %v812 = vsel %vm498, %v624, %v811
      %v813 = vsel %vm500, %v625, %v812
      %v814 = vsel %vm502, %v626, %v813
      %v815 = vsel %vm504, %v627, %v814
      %v816 = vsel %vm506, %v628, %v815
      %v817 = vsel %vm508, %v803, %v816
      %v818 = vsel %vm496, %v631, %v630
      %v819 = vsel %vm498, %v632, %v818
      %v820 = vsel %vm500, %v633, %v819
      %v821 = vsel %vm502, %v634, %v820
      %v822 = vsel %vm504, %v635, %v821
      %v823 = vsel %vm506, %v636, %v822
      %v824 = vsel %vm508, %v804, %v823
      %v825 = vsel %vm496, %v639, %v638
      %v826 = vsel %vm498, %v640, %v825
      %v827 = vsel %vm500, %v641, %v826
      %v828 = vsel %vm502, %v642, %v827
      %v829 = vsel %vm504, %v643, %v828
      %v830 = vsel %vm506, %v644, %v829
      %v831 = vsel %vm508, %v805, %v830
      %v832 = vsel %vm496, %v647, %v646
      %v833 = vsel %vm498, %v648, %v832
      %v834 = vsel %vm500, %v649, %v833
      %v835 = vsel %vm502, %v650, %v834
      %v836 = vsel %vm504, %v651, %v835
      %v837 = vsel %vm506, %v652, %v836
      %v838 = vsel %vm508, %v806, %v837
      %v839 = vsel %vm496, %v655, %v654
      %v840 = vsel %vm498, %v656, %v839
      %v841 = vsel %vm500, %v657, %v840
      %v842 = vsel %vm502, %v658, %v841
      %v843 = vsel %vm504, %v659, %v842
      %v844 = vsel %vm506, %v660, %v843
      %v845 = vsel %vm508, %v807, %v844
      %v846 = vsel %vm496, %v663, %v662
      %v847 = vsel %vm498, %v664, %v846
      %v848 = vsel %vm500, %v665, %v847
      %v849 = vsel %vm502, %v666, %v848
      %v850 = vsel %vm504, %v667, %v849
      %v851 = vsel %vm506, %v668, %v850
      %v852 = vsel %vm508, %v808, %v851
      %v853 = vsel %vm496, %v671, %v670
      %v854 = vsel %vm498, %v672, %v853
      %v855 = vsel %vm500, %v673, %v854
      %v856 = vsel %vm502, %v674, %v855
      %v857 = vsel %vm504, %v675, %v856
      %v858 = vsel %vm506, %v676, %v857
      %v859 = vsel %vm508, %v809, %v858
      %v860 = vsel %vm496, %v679, %v678
      %v861 = vsel %vm498, %v680, %v860
      %v862 = vsel %vm500, %v681, %v861
      %v863 = vsel %vm502, %v682, %v862
      %v864 = vsel %vm504, %v683, %v863
      %v865 = vsel %vm506, %v684, %v864
      %v866 = vsel %vm508, %v810, %v865
      %v867 = vsel %vm559, %v817, 0
      %v869 = vsel %vm559, %v824, 0
      %v871 = vsel %vm559, %v831, 0
      %v873 = vsel %vm559, %v838, 0
      %v875 = vsel %vm559, %v845, 0
      %v877 = vsel %vm559, %v852, 0
      %v879 = vsel %vm559, %v859, 0
      %v881 = vsel %vm559, %v866, 0
      %v884 = vsel %vm576, %v802, 0
      %886 = vmatpush.msra.mxu0 0.0
      %887 = vmatpush.msra.mxu0 0.0
      %888 = vmatpush.msra.mxu0 0.0
      %889 = vmatpush.msra.mxu0 0.0
      %890 = vmatpush.msra.mxu0 0.0
      %891 = vmatpush.msra.mxu0 0.0
      %892 = vmatpush.msra.mxu0 0.0
      %893 = vmatpush.msra.mxu0 0.0
      %894 = vmatpush.msra.mxu0 0.0
      %895 = vmatpush.msra.mxu0 0.0
      %896 = vmatpush.msra.mxu0 0.0
      %897 = vmatpush.msra.mxu0 0.0
      %898 = vmatpush.msra.mxu0 0.0
      %899 = vmatpush.msra.mxu0 0.0
      %900 = vmatpush.msra.mxu0 0.0
      %901 = vmatpush.msra.mxu0 %v884
      %902 = vmatmul.f32.gmra.mxu0 %v867
      %v903 = vpop.f32.mrf.mxu0
      %v904 = vadd.f32 0.0, %v903
      %905 = vmatmul.f32.gmra.mxu0 %v869
      %v906 = vpop.f32.mrf.mxu0
      %v907 = vadd.f32 0.0, %v906
      %908 = vmatmul.f32.gmra.mxu0 %v871
      %v909 = vpop.f32.mrf.mxu0
      %v910 = vadd.f32 0.0, %v909
      %911 = vmatmul.f32.gmra.mxu0 %v873
      %v912 = vpop.f32.mrf.mxu0
      %v913 = vadd.f32 0.0, %v912
      %914 = vmatmul.f32.gmra.mxu0 %v875
      %v915 = vpop.f32.mrf.mxu0
      %v916 = vadd.f32 0.0, %v915
      %917 = vmatmul.f32.gmra.mxu0 %v877
      %v918 = vpop.f32.mrf.mxu0
      %v919 = vadd.f32 0.0, %v918
      %920 = vmatmul.f32.gmra.mxu0 %v879
      %v921 = vpop.f32.mrf.mxu0
      %v922 = vadd.f32 0.0, %v921
      %923 = vmatmul.f32.gmra.mxu0 %v881
      %v924 = vpop.f32.mrf.mxu0
      %v925 = vadd.f32 0.0, %v924
      %926 = vdwg.mxu0
      %v927 = vadd.f32 %v778, %v904
      %v928 = vadd.f32 %v781, %v907
      %v929 = vadd.f32 %v784, %v910
      %v930 = vadd.f32 %v787, %v913
      %v931 = vadd.f32 %v790, %v916
      %v932 = vadd.f32 %v793, %v919
      %v933 = vadd.f32 %v796, %v922
      %v934 = vadd.f32 %v799, %v925
      %s935 = scalar_lea.vmem %s1, 12
      %v936 = vld [vmem:[%s935] sm:$0x7]
      %v937 = vperm.slane %v228, 0
      %v938 = vperm.slane %v333, 0
      %v939 = vperm.slane %v334, 0
      %v940 = vperm.slane %v335, 0
      %v941 = vperm.slane %v229, 0
      %v942 = vperm.slane %v336, 0
      %v943 = vperm.slane %v337, 0
      %v944 = vperm.slane %v338, 0
      %v945 = vperm.slane %v234, 0
      %v946 = vperm.slane %v345, 0
      %v947 = vperm.slane %v346, 0
      %v948 = vperm.slane %v347, 0
      %v949 = vperm.slane %v235, 0
      %v950 = vperm.slane %v348, 0
      %v951 = vperm.slane %v349, 0
      %v952 = vperm.slane %v350, 0
      %v953 = vperm.slane %v240, 0
      %v954 = vperm.slane %v357, 0
      %v955 = vperm.slane %v358, 0
      %v956 = vperm.slane %v359, 0
      %v957 = vperm.slane %v241, 0
      %v958 = vperm.slane %v360, 0
      %v959 = vperm.slane %v361, 0
      %v960 = vperm.slane %v362, 0
      %v961 = vperm.slane %v246, 0
      %v962 = vperm.slane %v369, 0
      %v963 = vperm.slane %v370, 0
      %v964 = vperm.slane %v371, 0
      %v965 = vperm.slane %v247, 0
      %v966 = vperm.slane %v372, 0
      %v967 = vperm.slane %v373, 0
      %v968 = vperm.slane %v374, 0
      %v969 = vperm.slane %v252, 0
      %v970 = vperm.slane %v381, 0
      %v971 = vperm.slane %v382, 0
      %v972 = vperm.slane %v383, 0
      %v973 = vperm.slane %v253, 0
      %v974 = vperm.slane %v384, 0
      %v975 = vperm.slane %v385, 0
      %v976 = vperm.slane %v386, 0
      %v977 = vperm.slane %v258, 0
      %v978 = vperm.slane %v393, 0
      %v979 = vperm.slane %v394, 0
      %v980 = vperm.slane %v395, 0
      %v981 = vperm.slane %v259, 0
      %v982 = vperm.slane %v396, 0
      %v983 = vperm.slane %v397, 0
      %v984 = vperm.slane %v398, 0
      %v985 = vperm.slane %v264, 0
      %v986 = vperm.slane %v405, 0
      %v987 = vperm.slane %v406, 0
      %v988 = vperm.slane %v407, 0
      %v989 = vperm.slane %v265, 0
      %v990 = vperm.slane %v408, 0
      %v991 = vperm.slane %v409, 0
      %v992 = vperm.slane %v410, 0
      %v993 = vperm.slane %v270, 0
      %v994 = vperm.slane %v417, 0
      %v995 = vperm.slane %v418, 0
      %v996 = vperm.slane %v419, 0
      %v997 = vperm.slane %v271, 0
      %v998 = vperm.slane %v420, 0
      %v999 = vperm.slane %v421, 0
      %v1000 = vperm.slane %v422, 0
      %v1001 = vsel %vm496, %v938, %v937
      %v1002 = vsel %vm498, %v939, %v1001
      %v1003 = vsel %vm500, %v940, %v1002
      %v1004 = vsel %vm502, %v941, %v1003
      %v1005 = vsel %vm504, %v942, %v1004
      %v1006 = vsel %vm506, %v943, %v1005
      %v1007 = vsel %vm508, %v944, %v1006
      %v1008 = vsel %vm496, %v946, %v945
      %v1009 = vsel %vm498, %v947, %v1008
      %v1010 = vsel %vm500, %v948, %v1009
      %v1011 = vsel %vm502, %v949, %v1010
      %v1012 = vsel %vm504, %v950, %v1011
      %v1013 = vsel %vm506, %v951, %v1012
      %v1014 = vsel %vm508, %v952, %v1013
      %v1015 = vsel %vm496, %v954, %v953
      %v1016 = vsel %vm498, %v955, %v1015
      %v1017 = vsel %vm500, %v956, %v1016
      %v1018 = vsel %vm502, %v957, %v1017
      %v1019 = vsel %vm504, %v958, %v1018
      %v1020 = vsel %vm506, %v959, %v1019
      %v1021 = vsel %vm508, %v960, %v1020
      %v1022 = vsel %vm496, %v962, %v961
      %v1023 = vsel %vm498, %v963, %v1022
      %v1024 = vsel %vm500, %v964, %v1023
      %v1025 = vsel %vm502, %v965, %v1024
      %v1026 = vsel %vm504, %v966, %v1025
      %v1027 = vsel %vm506, %v967, %v1026
      %v1028 = vsel %vm508, %v968, %v1027
      %v1029 = vsel %vm496, %v970, %v969
      %v1030 = vsel %vm498, %v971, %v1029
      %v1031 = vsel %vm500, %v972, %v1030
      %v1032 = vsel %vm502, %v973, %v1031
      %v1033 = vsel %vm504, %v974, %v1032
      %v1034 = vsel %vm506, %v975, %v1033
      %v1035 = vsel %vm508, %v976, %v1034
      %v1036 = vsel %vm496, %v978, %v977
      %v1037 = vsel %vm498, %v979, %v1036
      %v1038 = vsel %vm500, %v980, %v1037
      %v1039 = vsel %vm502, %v981, %v1038
      %v1040 = vsel %vm504, %v982, %v1039
      %v1041 = vsel %vm506, %v983, %v1040
      %v1042 = vsel %vm508, %v984, %v1041
      %v1043 = vsel %vm496, %v986, %v985
      %v1044 = vsel %vm498, %v987, %v1043
      %v1045 = vsel %vm500, %v988, %v1044
      %v1046 = vsel %vm502, %v989, %v1045
      %v1047 = vsel %vm504, %v990, %v1046
      %v1048 = vsel %vm506, %v991, %v1047
      %v1049 = vsel %vm508, %v992, %v1048
      %v1050 = vsel %vm496, %v994, %v993
      %v1051 = vsel %vm498, %v995, %v1050
      %v1052 = vsel %vm500, %v996, %v1051
      %v1053 = vsel %vm502, %v997, %v1052
      %v1054 = vsel %vm504, %v998, %v1053
      %v1055 = vsel %vm506, %v999, %v1054
      %v1056 = vsel %vm508, %v1000, %v1055
      %v1057 = vsel %vm559, %v1007, 0
      %v1059 = vsel %vm559, %v1014, 0
      %v1061 = vsel %vm559, %v1021, 0
      %v1063 = vsel %vm559, %v1028, 0
      %v1065 = vsel %vm559, %v1035, 0
      %v1067 = vsel %vm559, %v1042, 0
      %v1069 = vsel %vm559, %v1049, 0
      %v1071 = vsel %vm559, %v1056, 0
      %v1074 = vsel %vm576, %v936, 0
      %1076 = vmatpush.msra.mxu0 0.0
      %1077 = vmatpush.msra.mxu0 0.0
      %1078 = vmatpush.msra.mxu0 0.0
      %1079 = vmatpush.msra.mxu0 0.0
      %1080 = vmatpush.msra.mxu0 0.0
      %1081 = vmatpush.msra.mxu0 0.0
      %1082 = vmatpush.msra.mxu0 0.0
      %1083 = vmatpush.msra.mxu0 0.0
      %1084 = vmatpush.msra.mxu0 0.0
      %1085 = vmatpush.msra.mxu0 0.0
      %1086 = vmatpush.msra.mxu0 0.0
      %1087 = vmatpush.msra.mxu0 0.0
      %1088 = vmatpush.msra.mxu0 0.0
      %1089 = vmatpush.msra.mxu0 0.0
      %1090 = vmatpush.msra.mxu0 0.0
      %1091 = vmatpush.msra.mxu0 %v1074
      %1092 = vmatmul.f32.gmra.mxu0 %v1057
      %v1093 = vpop.f32.mrf.mxu0
      %v1094 = vadd.f32 0.0, %v1093
      %1095 = vmatmul.f32.gmra.mxu0 %v1059
      %v1096 = vpop.f32.mrf.mxu0
      %v1097 = vadd.f32 0.0, %v1096
      %1098 = vmatmul.f32.gmra.mxu0 %v1061
      %v1099 = vpop.f32.mrf.mxu0
      %v1100 = vadd.f32 0.0, %v1099
      %1101 = vmatmul.f32.gmra.mxu0 %v1063
      %v1102 = vpop.f32.mrf.mxu0
      %v1103 = vadd.f32 0.0, %v1102
      %1104 = vmatmul.f32.gmra.mxu0 %v1065
      %v1105 = vpop.f32.mrf.mxu0
      %v1106 = vadd.f32 0.0, %v1105
      %1107 = vmatmul.f32.gmra.mxu0 %v1067
      %v1108 = vpop.f32.mrf.mxu0
      %v1109 = vadd.f32 0.0, %v1108
      %1110 = vmatmul.f32.gmra.mxu0 %v1069
      %v1111 = vpop.f32.mrf.mxu0
      %v1112 = vadd.f32 0.0, %v1111
      %1113 = vmatmul.f32.gmra.mxu0 %v1071
      %v1114 = vpop.f32.mrf.mxu0
      %v1115 = vadd.f32 0.0, %v1114
      %1116 = vdwg.mxu0
      %v1117 = vadd.f32 %v927, %v1094
      %v1118 = vadd.f32 %v928, %v1097
      %v1119 = vadd.f32 %v929, %v1100
      %v1120 = vadd.f32 %v930, %v1103
      %v1121 = vadd.f32 %v931, %v1106
      %v1122 = vadd.f32 %v932, %v1109
      %v1123 = vadd.f32 %v933, %v1112
      %v1124 = vadd.f32 %v934, %v1115
      %s1125 = scalar_lea.vmem %s1, 16
      %v1126 = vld [vmem:[%s1125] sm:$0x7]
      %v1127 = vperm.slane %v228, 1
      %v1128 = vperm.slane %v333, 1
      %v1129 = vperm.slane %v334, 1
      %v1130 = vperm.slane %v335, 1
      %v1131 = vperm.slane %v229, 1
      %v1132 = vperm.slane %v336, 1
      %v1133 = vperm.slane %v337, 1
      %v1134 = vperm.slane %v338, 1
      %v1135 = vperm.slane %v234, 1
      %v1136 = vperm.slane %v345, 1
      %v1137 = vperm.slane %v346, 1
      %v1138 = vperm.slane %v347, 1
      %v1139 = vperm.slane %v235, 1
      %v1140 = vperm.slane %v348, 1
      %v1141 = vperm.slane %v349, 1
      %v1142 = vperm.slane %v350, 1
      %v1143 = vperm.slane %v240, 1
      %v1144 = vperm.slane %v357, 1
      %v1145 = vperm.slane %v358, 1
      %v1146 = vperm.slane %v359, 1
      %v1147 = vperm.slane %v241, 1
      %v1148 = vperm.slane %v360, 1
      %v1149 = vperm.slane %v361, 1
      %v1150 = vperm.slane %v362, 1
      %v1151 = vperm.slane %v246, 1
      %v1152 = vperm.slane %v369, 1
      %v1153 = vperm.slane %v370, 1
      %v1154 = vperm.slane %v371, 1
      %v1155 = vperm.slane %v247, 1
      %v1156 = vperm.slane %v372, 1
      %v1157 = vperm.slane %v373, 1
      %v1158 = vperm.slane %v374, 1
      %v1159 = vperm.slane %v252, 1
      %v1160 = vperm.slane %v381, 1
      %v1161 = vperm.slane %v382, 1
      %v1162 = vperm.slane %v383, 1
      %v1163 = vperm.slane %v253, 1
      %v1164 = vperm.slane %v384, 1
      %v1165 = vperm.slane %v385, 1
      %v1166 = vperm.slane %v386, 1
      %v1167 = vperm.slane %v258, 1
      %v1168 = vperm.slane %v393, 1
      %v1169 = vperm.slane %v394, 1
      %v1170 = vperm.slane %v395, 1
      %v1171 = vperm.slane %v259, 1
      %v1172 = vperm.slane %v396, 1
      %v1173 = vperm.slane %v397, 1
      %v1174 = vperm.slane %v398, 1
      %v1175 = vperm.slane %v264, 1
      %v1176 = vperm.slane %v405, 1
      %v1177 = vperm.slane %v406, 1
      %v1178 = vperm.slane %v407, 1
      %v1179 = vperm.slane %v265, 1
      %v1180 = vperm.slane %v408, 1
      %v1181 = vperm.slane %v409, 1
      %v1182 = vperm.slane %v410, 1
      %v1183 = vperm.slane %v270, 1
      %v1184 = vperm.slane %v417, 1
      %v1185 = vperm.slane %v418, 1
      %v1186 = vperm.slane %v419, 1
      %v1187 = vperm.slane %v271, 1
      %v1188 = vperm.slane %v420, 1
      %v1189 = vperm.slane %v421, 1
      %v1190 = vperm.slane %v422, 1
      %v1191 = vsel %vm496, %v1128, %v1127
      %v1192 = vsel %vm498, %v1129, %v1191
      %v1193 = vsel %vm500, %v1130, %v1192
      %v1194 = vsel %vm502, %v1131, %v1193
      %v1195 = vsel %vm504, %v1132, %v1194
      %v1196 = vsel %vm506, %v1133, %v1195
      %v1197 = vsel %vm508, %v1134, %v1196
      %v1198 = vsel %vm496, %v1136, %v1135
      %v1199 = vsel %vm498, %v1137, %v1198
      %v1200 = vsel %vm500, %v1138, %v1199
      %v1201 = vsel %vm502, %v1139, %v1200
      %v1202 = vsel %vm504, %v1140, %v1201
      %v1203 = vsel %vm506, %v1141, %v1202
      %v1204 = vsel %vm508, %v1142, %v1203
      %v1205 = vsel %vm496, %v1144, %v1143
      %v1206 = vsel %vm498, %v1145, %v1205
      %v1207 = vsel %vm500, %v1146, %v1206
      %v1208 = vsel %vm502, %v1147, %v1207
      %v1209 = vsel %vm504, %v1148, %v1208
      %v1210 = vsel %vm506, %v1149, %v1209
      %v1211 = vsel %vm508, %v1150, %v1210
      %v1212 = vsel %vm496, %v1152, %v1151
      %v1213 = vsel %vm498, %v1153, %v1212
      %v1214 = vsel %vm500, %v1154, %v1213
      %v1215 = vsel %vm502, %v1155, %v1214
      %v1216 = vsel %vm504, %v1156, %v1215
      %v1217 = vsel %vm506, %v1157, %v1216
      %v1218 = vsel %vm508, %v1158, %v1217
      %v1219 = vsel %vm496, %v1160, %v1159
      %v1220 = vsel %vm498, %v1161, %v1219
      %v1221 = vsel %vm500, %v1162, %v1220
      %v1222 = vsel %vm502, %v1163, %v1221
      %v1223 = vsel %vm504, %v1164, %v1222
      %v1224 = vsel %vm506, %v1165, %v1223
      %v1225 = vsel %vm508, %v1166, %v1224
      %v1226 = vsel %vm496, %v1168, %v1167
      %v1227 = vsel %vm498, %v1169, %v1226
      %v1228 = vsel %vm500, %v1170, %v1227
      %v1229 = vsel %vm502, %v1171, %v1228
      %v1230 = vsel %vm504, %v1172, %v1229
      %v1231 = vsel %vm506, %v1173, %v1230
      %v1232 = vsel %vm508, %v1174, %v1231
      %v1233 = vsel %vm496, %v1176, %v1175
      %v1234 = vsel %vm498, %v1177, %v1233
      %v1235 = vsel %vm500, %v1178, %v1234
      %v1236 = vsel %vm502, %v1179, %v1235
      %v1237 = vsel %vm504, %v1180, %v1236
      %v1238 = vsel %vm506, %v1181, %v1237
      %v1239 = vsel %vm508, %v1182, %v1238
      %v1240 = vsel %vm496, %v1184, %v1183
      %v1241 = vsel %vm498, %v1185, %v1240
      %v1242 = vsel %vm500, %v1186, %v1241
      %v1243 = vsel %vm502, %v1187, %v1242
      %v1244 = vsel %vm504, %v1188, %v1243
      %v1245 = vsel %vm506, %v1189, %v1244
      %v1246 = vsel %vm508, %v1190, %v1245
      %v1247 = vsel %vm559, %v1197, 0
      %v1249 = vsel %vm559, %v1204, 0
      %v1251 = vsel %vm559, %v1211, 0
      %v1253 = vsel %vm559, %v1218, 0
      %v1255 = vsel %vm559, %v1225, 0
      %v1257 = vsel %vm559, %v1232, 0
      %v1259 = vsel %vm559, %v1239, 0
      %v1261 = vsel %vm559, %v1246, 0
      %v1264 = vsel %vm576, %v1126, 0
      %1266 = vmatpush.msra.mxu0 0.0
      %1267 = vmatpush.msra.mxu0 0.0
      %1268 = vmatpush.msra.mxu0 0.0
      %1269 = vmatpush.msra.mxu0 0.0
      %1270 = vmatpush.msra.mxu0 0.0
      %1271 = vmatpush.msra.mxu0 0.0
      %1272 = vmatpush.msra.mxu0 0.0
      %1273 = vmatpush.msra.mxu0 0.0
      %1274 = vmatpush.msra.mxu0 0.0
      %1275 = vmatpush.msra.mxu0 0.0
      %1276 = vmatpush.msra.mxu0 0.0
      %1277 = vmatpush.msra.mxu0 0.0
      %1278 = vmatpush.msra.mxu0 0.0
      %1279 = vmatpush.msra.mxu0 0.0
      %1280 = vmatpush.msra.mxu0 0.0
      %1281 = vmatpush.msra.mxu0 %v1264
      %1282 = vmatmul.f32.gmra.mxu0 %v1247
      %v1283 = vpop.f32.mrf.mxu0
      %v1284 = vadd.f32 0.0, %v1283
      %1285 = vmatmul.f32.gmra.mxu0 %v1249
      %v1286 = vpop.f32.mrf.mxu0
      %v1287 = vadd.f32 0.0, %v1286
      %1288 = vmatmul.f32.gmra.mxu0 %v1251
      %v1289 = vpop.f32.mrf.mxu0
      %v1290 = vadd.f32 0.0, %v1289
      %1291 = vmatmul.f32.gmra.mxu0 %v1253
      %v1292 = vpop.f32.mrf.mxu0
      %v1293 = vadd.f32 0.0, %v1292
      %1294 = vmatmul.f32.gmra.mxu0 %v1255
      %v1295 = vpop.f32.mrf.mxu0
      %v1296 = vadd.f32 0.0, %v1295
      %1297 = vmatmul.f32.gmra.mxu0 %v1257
      %v1298 = vpop.f32.mrf.mxu0
      %v1299 = vadd.f32 0.0, %v1298
      %1300 = vmatmul.f32.gmra.mxu0 %v1259
      %v1301 = vpop.f32.mrf.mxu0
      %v1302 = vadd.f32 0.0, %v1301
      %1303 = vmatmul.f32.gmra.mxu0 %v1261
      %v1304 = vpop.f32.mrf.mxu0
      %v1305 = vadd.f32 0.0, %v1304
      %1306 = vdwg.mxu0
      %v1307 = vadd.f32 %v1117, %v1284
      %v1308 = vadd.f32 %v1118, %v1287
      %v1309 = vadd.f32 %v1119, %v1290
      %v1310 = vadd.f32 %v1120, %v1293
      %v1311 = vadd.f32 %v1121, %v1296
      %v1312 = vadd.f32 %v1122, %v1299
      %v1313 = vadd.f32 %v1123, %v1302
      %v1314 = vadd.f32 %v1124, %v1305
      %s1315 = scalar_lea.vmem %s1, 20
      %v1316 = vld [vmem:[%s1315] sm:$0x7]
      %v1317 = vperm.slane %v230, 0
      %v1318 = vperm.slane %v236, 0
      %v1319 = vperm.slane %v242, 0
      %v1320 = vperm.slane %v248, 0
      %v1321 = vperm.slane %v254, 0
      %v1322 = vperm.slane %v260, 0
      %v1323 = vperm.slane %v266, 0
      %v1324 = vperm.slane %v272, 0
      %v1325 = vsel %vm496, %v939, %v938
      %v1326 = vsel %vm498, %v940, %v1325
      %v1327 = vsel %vm500, %v941, %v1326
      %v1328 = vsel %vm502, %v942, %v1327
      %v1329 = vsel %vm504, %v943, %v1328
      %v1330 = vsel %vm506, %v944, %v1329
      %v1331 = vsel %vm508, %v1317, %v1330
      %v1332 = vsel %vm496, %v947, %v946
      %v1333 = vsel %vm498, %v948, %v1332
      %v1334 = vsel %vm500, %v949, %v1333
      %v1335 = vsel %vm502, %v950, %v1334
      %v1336 = vsel %vm504, %v951, %v1335
      %v1337 = vsel %vm506, %v952, %v1336
      %v1338 = vsel %vm508, %v1318, %v1337
      %v1339 = vsel %vm496, %v955, %v954
      %v1340 = vsel %vm498, %v956, %v1339
      %v1341 = vsel %vm500, %v957, %v1340
      %v1342 = vsel %vm502, %v958, %v1341
      %v1343 = vsel %vm504, %v959, %v1342
      %v1344 = vsel %vm506, %v960, %v1343
      %v1345 = vsel %vm508, %v1319, %v1344
      %v1346 = vsel %vm496, %v963, %v962
      %v1347 = vsel %vm498, %v964, %v1346
      %v1348 = vsel %vm500, %v965, %v1347
      %v1349 = vsel %vm502, %v966, %v1348
      %v1350 = vsel %vm504, %v967, %v1349
      %v1351 = vsel %vm506, %v968, %v1350
      %v1352 = vsel %vm508, %v1320, %v1351
      %v1353 = vsel %vm496, %v971, %v970
      %v1354 = vsel %vm498, %v972, %v1353
      %v1355 = vsel %vm500, %v973, %v1354
      %v1356 = vsel %vm502, %v974, %v1355
      %v1357 = vsel %vm504, %v975, %v1356
      %v1358 = vsel %vm506, %v976, %v1357
      %v1359 = vsel %vm508, %v1321, %v1358
      %v1360 = vsel %vm496, %v979, %v978
      %v1361 = vsel %vm498, %v980, %v1360
      %v1362 = vsel %vm500, %v981, %v1361
      %v1363 = vsel %vm502, %v982, %v1362
      %v1364 = vsel %vm504, %v983, %v1363
      %v1365 = vsel %vm506, %v984, %v1364
      %v1366 = vsel %vm508, %v1322, %v1365
      %v1367 = vsel %vm496, %v987, %v986
      %v1368 = vsel %vm498, %v988, %v1367
      %v1369 = vsel %vm500, %v989, %v1368
      %v1370 = vsel %vm502, %v990, %v1369
      %v1371 = vsel %vm504, %v991, %v1370
      %v1372 = vsel %vm506, %v992, %v1371
      %v1373 = vsel %vm508, %v1323, %v1372
      %v1374 = vsel %vm496, %v995, %v994
      %v1375 = vsel %vm498, %v996, %v1374
      %v1376 = vsel %vm500, %v997, %v1375
      %v1377 = vsel %vm502, %v998, %v1376
      %v1378 = vsel %vm504, %v999, %v1377
      %v1379 = vsel %vm506, %v1000, %v1378
      %v1380 = vsel %vm508, %v1324, %v1379
      %v1381 = vsel %vm559, %v1331, 0
      %v1383 = vsel %vm559, %v1338, 0
      %v1385 = vsel %vm559, %v1345, 0
      %v1387 = vsel %vm559, %v1352, 0
      %v1389 = vsel %vm559, %v1359, 0
      %v1391 = vsel %vm559, %v1366, 0
      %v1393 = vsel %vm559, %v1373, 0
      %v1395 = vsel %vm559, %v1380, 0
      %v1398 = vsel %vm576, %v1316, 0
      %1400 = vmatpush.msra.mxu0 0.0
      %1401 = vmatpush.msra.mxu0 0.0
      %1402 = vmatpush.msra.mxu0 0.0
      %1403 = vmatpush.msra.mxu0 0.0
      %1404 = vmatpush.msra.mxu0 0.0
      %1405 = vmatpush.msra.mxu0 0.0
      %1406 = vmatpush.msra.mxu0 0.0
      %1407 = vmatpush.msra.mxu0 0.0
      %1408 = vmatpush.msra.mxu0 0.0
      %1409 = vmatpush.msra.mxu0 0.0
      %1410 = vmatpush.msra.mxu0 0.0
      %1411 = vmatpush.msra.mxu0 0.0
      %1412 = vmatpush.msra.mxu0 0.0
      %1413 = vmatpush.msra.mxu0 0.0
      %1414 = vmatpush.msra.mxu0 0.0
      %1415 = vmatpush.msra.mxu0 %v1398
      %1416 = vmatmul.f32.gmra.mxu0 %v1381
      %v1417 = vpop.f32.mrf.mxu0
      %v1418 = vadd.f32 0.0, %v1417
      %1419 = vmatmul.f32.gmra.mxu0 %v1383
      %v1420 = vpop.f32.mrf.mxu0
      %v1421 = vadd.f32 0.0, %v1420
      %1422 = vmatmul.f32.gmra.mxu0 %v1385
      %v1423 = vpop.f32.mrf.mxu0
      %v1424 = vadd.f32 0.0, %v1423
      %1425 = vmatmul.f32.gmra.mxu0 %v1387
      %v1426 = vpop.f32.mrf.mxu0
      %v1427 = vadd.f32 0.0, %v1426
      %1428 = vmatmul.f32.gmra.mxu0 %v1389
      %v1429 = vpop.f32.mrf.mxu0
      %v1430 = vadd.f32 0.0, %v1429
      %1431 = vmatmul.f32.gmra.mxu0 %v1391
      %v1432 = vpop.f32.mrf.mxu0
      %v1433 = vadd.f32 0.0, %v1432
      %1434 = vmatmul.f32.gmra.mxu0 %v1393
      %v1435 = vpop.f32.mrf.mxu0
      %v1436 = vadd.f32 0.0, %v1435
      %1437 = vmatmul.f32.gmra.mxu0 %v1395
      %v1438 = vpop.f32.mrf.mxu0
      %v1439 = vadd.f32 0.0, %v1438
      %1440 = vdwg.mxu0
      %v1441 = vadd.f32 %v1307, %v1418
      %v1442 = vadd.f32 %v1308, %v1421
      %v1443 = vadd.f32 %v1309, %v1424
      %v1444 = vadd.f32 %v1310, %v1427
      %v1445 = vadd.f32 %v1311, %v1430
      %v1446 = vadd.f32 %v1312, %v1433
      %v1447 = vadd.f32 %v1313, %v1436
      %v1448 = vadd.f32 %v1314, %v1439
      %s1449 = scalar_lea.vmem %s1, 24
      %v1450 = vld [vmem:[%s1449] sm:$0x7]
      %v1451 = vperm.slane %v273, 0
      %v1452 = vperm.slane %v423, 0
      %v1453 = vperm.slane %v424, 0
      %v1454 = vperm.slane %v425, 0
      %v1455 = vperm.slane %v274, 0
      %v1456 = vperm.slane %v426, 0
      %v1457 = vperm.slane %v427, 0
      %v1458 = vperm.slane %v428, 0
      %v1459 = vsel %vm496, %v1452, %v1451
      %v1460 = vsel %vm498, %v1453, %v1459
      %v1461 = vsel %vm500, %v1454, %v1460
      %v1462 = vsel %vm502, %v1455, %v1461
      %v1463 = vsel %vm504, %v1456, %v1462
      %v1464 = vsel %vm506, %v1457, %v1463
      %v1465 = vsel %vm508, %v1458, %v1464
      %v1466 = vsel %vm559, %v1465, 0
      %v1469 = vsel %vm576, %v1450, 0
      %1471 = vmatpush.msra.mxu0 0.0
      %1472 = vmatpush.msra.mxu0 0.0
      %1473 = vmatpush.msra.mxu0 0.0
      %1474 = vmatpush.msra.mxu0 0.0
      %1475 = vmatpush.msra.mxu0 0.0
      %1476 = vmatpush.msra.mxu0 0.0
      %1477 = vmatpush.msra.mxu0 0.0
      %1478 = vmatpush.msra.mxu0 0.0
      %1479 = vmatpush.msra.mxu0 0.0
      %1480 = vmatpush.msra.mxu0 0.0
      %1481 = vmatpush.msra.mxu0 0.0
      %1482 = vmatpush.msra.mxu0 0.0
      %1483 = vmatpush.msra.mxu0 0.0
      %1484 = vmatpush.msra.mxu0 0.0
      %1485 = vmatpush.msra.mxu0 0.0
      %1486 = vmatpush.msra.mxu0 %v1469
      %1487 = vmatmul.f32.gmra.mxu0 %v743
      %v1488 = vpop.f32.mrf.mxu0
      %v1489 = vadd.f32 0.0, %v1488
      %1490 = vmatmul.f32.gmra.mxu0 %v745
      %v1491 = vpop.f32.mrf.mxu0
      %v1492 = vadd.f32 0.0, %v1491
      %1493 = vmatmul.f32.gmra.mxu0 %v747
      %v1494 = vpop.f32.mrf.mxu0
      %v1495 = vadd.f32 0.0, %v1494
      %1496 = vmatmul.f32.gmra.mxu0 %v749
      %v1497 = vpop.f32.mrf.mxu0
      %v1498 = vadd.f32 0.0, %v1497
      %1499 = vmatmul.f32.gmra.mxu0 %v751
      %v1500 = vpop.f32.mrf.mxu0
      %v1501 = vadd.f32 0.0, %v1500
      %1502 = vmatmul.f32.gmra.mxu0 %v753
      %v1503 = vpop.f32.mrf.mxu0
      %v1504 = vadd.f32 0.0, %v1503
      %1505 = vmatmul.f32.gmra.mxu0 %v755
      %v1506 = vpop.f32.mrf.mxu0
      %v1507 = vadd.f32 0.0, %v1506
      %1508 = vmatmul.f32.gmra.mxu0 %v1466
      %v1509 = vpop.f32.mrf.mxu0
      %v1510 = vadd.f32 0.0, %v1509
      %1511 = vdwg.mxu0
      %v1512 = vadd.f32 %v1441, %v1489
      %v1513 = vadd.f32 %v1442, %v1492
      %v1514 = vadd.f32 %v1443, %v1495
      %v1515 = vadd.f32 %v1444, %v1498
      %v1516 = vadd.f32 %v1445, %v1501
      %v1517 = vadd.f32 %v1446, %v1504
      %v1518 = vadd.f32 %v1447, %v1507
      %v1519 = vadd.f32 %v1448, %v1510
      %s1520 = scalar_lea.vmem %s1, 28
      %v1521 = vld [vmem:[%s1520] sm:$0x7]
      %v1522 = vperm.slane %v273, 1
      %v1523 = vperm.slane %v423, 1
      %v1524 = vperm.slane %v424, 1
      %v1525 = vperm.slane %v425, 1
      %v1526 = vperm.slane %v274, 1
      %v1527 = vperm.slane %v426, 1
      %v1528 = vperm.slane %v427, 1
      %v1529 = vperm.slane %v428, 1
      %v1530 = vsel %vm496, %v1523, %v1522
      %v1531 = vsel %vm498, %v1524, %v1530
      %v1532 = vsel %vm500, %v1525, %v1531
      %v1533 = vsel %vm502, %v1526, %v1532
      %v1534 = vsel %vm504, %v1527, %v1533
      %v1535 = vsel %vm506, %v1528, %v1534
      %v1536 = vsel %vm508, %v1529, %v1535
      %v1537 = vsel %vm559, %v1536, 0
      %v1540 = vsel %vm576, %v1521, 0
      %1542 = vmatpush.msra.mxu0 0.0
      %1543 = vmatpush.msra.mxu0 0.0
      %1544 = vmatpush.msra.mxu0 0.0
      %1545 = vmatpush.msra.mxu0 0.0
      %1546 = vmatpush.msra.mxu0 0.0
      %1547 = vmatpush.msra.mxu0 0.0
      %1548 = vmatpush.msra.mxu0 0.0
      %1549 = vmatpush.msra.mxu0 0.0
      %1550 = vmatpush.msra.mxu0 0.0
      %1551 = vmatpush.msra.mxu0 0.0
      %1552 = vmatpush.msra.mxu0 0.0
      %1553 = vmatpush.msra.mxu0 0.0
      %1554 = vmatpush.msra.mxu0 0.0
      %1555 = vmatpush.msra.mxu0 0.0
      %1556 = vmatpush.msra.mxu0 0.0
      %1557 = vmatpush.msra.mxu0 %v1540
      %1558 = vmatmul.f32.gmra.mxu0 %v562
      %v1559 = vpop.f32.mrf.mxu0
      %v1560 = vadd.f32 0.0, %v1559
      %1561 = vmatmul.f32.gmra.mxu0 %v564
      %v1562 = vpop.f32.mrf.mxu0
      %v1563 = vadd.f32 0.0, %v1562
      %1564 = vmatmul.f32.gmra.mxu0 %v566
      %v1565 = vpop.f32.mrf.mxu0
      %v1566 = vadd.f32 0.0, %v1565
      %1567 = vmatmul.f32.gmra.mxu0 %v568
      %v1568 = vpop.f32.mrf.mxu0
      %v1569 = vadd.f32 0.0, %v1568
      %1570 = vmatmul.f32.gmra.mxu0 %v570
      %v1571 = vpop.f32.mrf.mxu0
      %v1572 = vadd.f32 0.0, %v1571
      %1573 = vmatmul.f32.gmra.mxu0 %v572
      %v1574 = vpop.f32.mrf.mxu0
      %v1575 = vadd.f32 0.0, %v1574
      %1576 = vmatmul.f32.gmra.mxu0 %v574
      %v1577 = vpop.f32.mrf.mxu0
      %v1578 = vadd.f32 0.0, %v1577
      %1579 = vmatmul.f32.gmra.mxu0 %v1537
      %v1580 = vpop.f32.mrf.mxu0
      %v1581 = vadd.f32 0.0, %v1580
      %1582 = vdwg.mxu0
      %v1583 = vadd.f32 %v1512, %v1560
      %v1584 = vadd.f32 %v1513, %v1563
      %v1585 = vadd.f32 %v1514, %v1566
      %v1586 = vadd.f32 %v1515, %v1569
      %v1587 = vadd.f32 %v1516, %v1572
      %v1588 = vadd.f32 %v1517, %v1575
      %v1589 = vadd.f32 %v1518, %v1578
      %v1590 = vadd.f32 %v1519, %v1581
      %s1591 = scalar_lea.vmem %s1, 32
      %v1592 = vld [vmem:[%s1591] sm:$0x7]
      %v1593 = vperm.slane %v275, 0
      %v1594 = vsel %vm496, %v1453, %v1452
      %v1595 = vsel %vm498, %v1454, %v1594
      %v1596 = vsel %vm500, %v1455, %v1595
      %v1597 = vsel %vm502, %v1456, %v1596
      %v1598 = vsel %vm504, %v1457, %v1597
      %v1599 = vsel %vm506, %v1458, %v1598
      %v1600 = vsel %vm508, %v1593, %v1599
      %v1601 = vsel %vm559, %v1600, 0
      %v1604 = vsel %vm576, %v1592, 0
      %1606 = vmatpush.msra.mxu0 0.0
      %1607 = vmatpush.msra.mxu0 0.0
      %1608 = vmatpush.msra.mxu0 0.0
      %1609 = vmatpush.msra.mxu0 0.0
      %1610 = vmatpush.msra.mxu0 0.0
      %1611 = vmatpush.msra.mxu0 0.0
      %1612 = vmatpush.msra.mxu0 0.0
      %1613 = vmatpush.msra.mxu0 0.0
      %1614 = vmatpush.msra.mxu0 0.0
      %1615 = vmatpush.msra.mxu0 0.0
      %1616 = vmatpush.msra.mxu0 0.0
      %1617 = vmatpush.msra.mxu0 0.0
      %1618 = vmatpush.msra.mxu0 0.0
      %1619 = vmatpush.msra.mxu0 0.0
      %1620 = vmatpush.msra.mxu0 0.0
      %1621 = vmatpush.msra.mxu0 %v1604
      %1622 = vmatmul.f32.gmra.mxu0 %v869
      %v1623 = vpop.f32.mrf.mxu0
      %v1624 = vadd.f32 0.0, %v1623
      %1625 = vmatmul.f32.gmra.mxu0 %v871
      %v1626 = vpop.f32.mrf.mxu0
      %v1627 = vadd.f32 0.0, %v1626
      %1628 = vmatmul.f32.gmra.mxu0 %v873
      %v1629 = vpop.f32.mrf.mxu0
      %v1630 = vadd.f32 0.0, %v1629
      %1631 = vmatmul.f32.gmra.mxu0 %v875
      %v1632 = vpop.f32.mrf.mxu0
      %v1633 = vadd.f32 0.0, %v1632
      %1634 = vmatmul.f32.gmra.mxu0 %v877
      %v1635 = vpop.f32.mrf.mxu0
      %v1636 = vadd.f32 0.0, %v1635
      %1637 = vmatmul.f32.gmra.mxu0 %v879
      %v1638 = vpop.f32.mrf.mxu0
      %v1639 = vadd.f32 0.0, %v1638
      %1640 = vmatmul.f32.gmra.mxu0 %v881
      %v1641 = vpop.f32.mrf.mxu0
      %v1642 = vadd.f32 0.0, %v1641
      %1643 = vmatmul.f32.gmra.mxu0 %v1601
      %v1644 = vpop.f32.mrf.mxu0
      %v1645 = vadd.f32 0.0, %v1644
      %1646 = vdwg.mxu0
      %v1647 = vadd.f32 %v1583, %v1624
      %v1648 = vadd.f32 %v1584, %v1627
      %v1649 = vadd.f32 %v1585, %v1630
      %v1650 = vadd.f32 %v1586, %v1633
      %v1651 = vadd.f32 %v1587, %v1636
      %v1652 = vadd.f32 %v1588, %v1639
      %v1653 = vadd.f32 %v1589, %v1642
      %v1654 = vadd.f32 %v1590, %v1645
      %v1655 = vld [vmem:[%s2] sm:$0x1]
      %v1657 = vperm.slane %v1655, 0
      %v1659 = vadd.f32 %v1647, %v1657
      %v1660 = vadd.f32 %v1648, %v1657
      %v1661 = vadd.f32 %v1649, %v1657
      %v1662 = vadd.f32 %v1650, %v1657
      %v1663 = vadd.f32 %v1651, %v1657
      %v1664 = vadd.f32 %v1652, %v1657
      %v1665 = vadd.f32 %v1653, %v1657
      %v1666 = vadd.f32 %v1654, %v1657
      %vm1667 = vcmask 130048
      %1668 = vst.msk [vmem:[#allocation2] sm:$0xff] %vm1667, 0.0
      %vm1669 = vcmask 123904
      %1670 = vst.msk [vmem:[#allocation2 + $0x8] sm:$0x3] %vm1669, 0.0
      %1671 = vst.msk [vmem:[#allocation2 + $0x10] sm:$0xff] %vm1667, 0.0
      %1672 = vst.msk [vmem:[#allocation2 + $0x18] sm:$0x3] %vm1669, 0.0
      %1673 = vst.msk [vmem:[#allocation2 + $0x20] sm:$0xff] %vm1667, 0.0
      %1674 = vst.msk [vmem:[#allocation2 + $0x28] sm:$0x3] %vm1669, 0.0
      %1675 = vst.msk [vmem:[#allocation2 + $0x30] sm:$0xff] %vm1667, 0.0
      %1676 = vst.msk [vmem:[#allocation2 + $0x38] sm:$0x3] %vm1669, 0.0
      %1677 = vst.msk [vmem:[#allocation2 + $0x40] sm:$0xff] %vm1667, 0.0
      %1678 = vst.msk [vmem:[#allocation2 + $0x48] sm:$0x3] %vm1669, 0.0
      %1679 = vst.msk [vmem:[#allocation2 + $0x50] sm:$0xff] %vm1667, 0.0
      %1680 = vst.msk [vmem:[#allocation2 + $0x58] sm:$0x3] %vm1669, 0.0
      %1681 = vst.msk [vmem:[#allocation2 + $0x60] sm:$0xff] %vm1667, 0.0
      %1682 = vst.msk [vmem:[#allocation2 + $0x68] sm:$0x3] %vm1669, 0.0
      %1683 = vst.msk [vmem:[#allocation2 + $0x70] sm:$0xff] %vm1667, 0.0
      %1684 = vst.msk [vmem:[#allocation2 + $0x78] sm:$0x3] %vm1669, 0.0
      %1685 = vst.msk [vmem:[#allocation2 + $0x80] sm:$0xff] %vm1667, 0.0
      %1686 = vst.msk [vmem:[#allocation2 + $0x88] sm:$0x3] %vm1669, 0.0
      %1687 = vst.msk [vmem:[#allocation2 + $0x90] sm:$0xff] %vm1667, 0.0
      %1688 = vst.msk [vmem:[#allocation2 + $0x98] sm:$0x3] %vm1669, 0.0
      %s1689 = scalar_lea.vmem [#allocation2], 16
      %1690 = vst.msk [vmem:[%s1689 + $0x1] sm:$0xff] %vm1667, %v1659
      %1691 = vst.msk [vmem:[%s1689 + $0x11] sm:$0xff] %vm1667, %v1660
      %1692 = vst.msk [vmem:[%s1689 + $0x21] sm:$0xff] %vm1667, %v1661
      %1693 = vst.msk [vmem:[%s1689 + $0x31] sm:$0xff] %vm1667, %v1662
      %1694 = vst.msk [vmem:[%s1689 + $0x41] sm:$0xff] %vm1667, %v1663
      %1695 = vst.msk [vmem:[%s1689 + $0x51] sm:$0xff] %vm1667, %v1664
      %1696 = vst.msk [vmem:[%s1689 + $0x61] sm:$0xff] %vm1667, %v1665
      %1697 = vst.msk [vmem:[%s1689 + $0x71] sm:$0xff] %vm1667, %v1666
      %v1698 = vld [vmem:[#allocation2] sm:$0xff]
      %v1699 = vld [vmem:[#allocation2 + $0x8] sm:$0x3]
      %v1700 = vld [vmem:[#allocation2 + $0x10] sm:$0xff]
      %v1701 = vld [vmem:[#allocation2 + $0x18] sm:$0x3]
      %v1702 = vld [vmem:[#allocation2 + $0x20] sm:$0xff]
      %v1703 = vld [vmem:[#allocation2 + $0x28] sm:$0x3]
      %v1704 = vld [vmem:[#allocation2 + $0x30] sm:$0xff]
      %v1705 = vld [vmem:[#allocation2 + $0x38] sm:$0x3]
      %v1706 = vld [vmem:[#allocation2 + $0x40] sm:$0xff]
      %v1707 = vld [vmem:[#allocation2 + $0x48] sm:$0x3]
      %v1708 = vld [vmem:[#allocation2 + $0x50] sm:$0xff]
      %v1709 = vld [vmem:[#allocation2 + $0x58] sm:$0x3]
      %v1710 = vld [vmem:[#allocation2 + $0x60] sm:$0xff]
      %v1711 = vld [vmem:[#allocation2 + $0x68] sm:$0x3]
      %v1712 = vld [vmem:[#allocation2 + $0x70] sm:$0xff]
      %v1713 = vld [vmem:[#allocation2 + $0x78] sm:$0x3]
      %v1714 = vld [vmem:[#allocation2 + $0x80] sm:$0xff]
      %v1715 = vld [vmem:[#allocation2 + $0x88] sm:$0x3]
      %v1734 = vrot.slane %v1698, 2
      %v1735 = vrot.slane %v1698, 4
      %v1736 = vrot.slane %v1698, 6
      %v1737 = vrot.slane %v1700, 2
      %v1738 = vrot.slane %v1700, 4
      %v1739 = vrot.slane %v1700, 6
      %v1740 = vrot.slane %v1702, 2
      %v1741 = vrot.slane %v1702, 4
      %v1742 = vrot.slane %v1702, 6
      %v1743 = vrot.slane %v1704, 2
      %v1744 = vrot.slane %v1704, 4
      %v1745 = vrot.slane %v1704, 6
      %v1746 = vrot.slane %v1706, 2
      %v1747 = vrot.slane %v1706, 4
      %v1748 = vrot.slane %v1706, 6
      %v1749 = vrot.slane %v1708, 2
      %v1750 = vrot.slane %v1708, 4
      %v1751 = vrot.slane %v1708, 6
      %v1752 = vrot.slane %v1710, 2
      %v1753 = vrot.slane %v1710, 4
      %v1754 = vrot.slane %v1710, 6
      %v1755 = vrot.slane %v1712, 2
      %v1756 = vrot.slane %v1712, 4
      %v1757 = vrot.slane %v1712, 6
      %v1758 = vrot.slane %v1714, 2
      %v1759 = vrot.slane %v1714, 4
      %v1760 = vrot.slane %v1714, 6
      %v1761 = vld [vmem:[%s3] sm:$0xff]
      %v1762 = vld [vmem:[%s3 + $0x8] sm:$0xff]
      %s1763 = scalar_lea.vmem %s3, 16
      %v1764 = vld [vmem:[%s1763] sm:$0xff]
      %v1765 = vld [vmem:[%s1763 + $0x8] sm:$0xff]
      %v1766 = vperm.slane %v1698, 1
      %v1767 = vperm.slane %v1734, 1
      %v1768 = vperm.slane %v1735, 1
      %v1769 = vperm.slane %v1736, 1
      %v1770 = vperm.slane %v1702, 1
      %v1771 = vperm.slane %v1740, 1
      %v1772 = vperm.slane %v1741, 1
      %v1773 = vperm.slane %v1742, 1
      %v1774 = vperm.slane %v1706, 1
      %v1775 = vperm.slane %v1746, 1
      %v1776 = vperm.slane %v1747, 1
      %v1777 = vperm.slane %v1748, 1
      %v1778 = vperm.slane %v1710, 1
      %v1779 = vperm.slane %v1752, 1
      %v1780 = vperm.slane %v1753, 1
      %v1781 = vperm.slane %v1754, 1
      %v1782 = vsel %vm496, %v1767, %v1766
      %v1783 = vsel %vm498, %v1768, %v1782
      %v1784 = vsel %vm500, %v1769, %v1783
      %v1785 = vsel %vm502, %v1770, %v1784
      %v1786 = vsel %vm504, %v1771, %v1785
      %v1787 = vsel %vm506, %v1772, %v1786
      %v1788 = vsel %vm508, %v1773, %v1787
      %v1789 = vsel %vm496, %v1775, %v1774
      %v1790 = vsel %vm498, %v1776, %v1789
      %v1791 = vsel %vm500, %v1777, %v1790
      %v1792 = vsel %vm502, %v1778, %v1791
      %v1793 = vsel %vm504, %v1779, %v1792
      %v1794 = vsel %vm506, %v1780, %v1793
      %v1795 = vsel %vm508, %v1781, %v1794
      %v1796 = vsel %vm1667, %v1788, 0
      %v1798 = vsel %vm1667, %v1795, 0
      %1800 = vmatpush.msra.mxu0 0.0
      %1801 = vmatpush.msra.mxu0 0.0
      %1802 = vmatpush.msra.mxu0 0.0
      %1803 = vmatpush.msra.mxu0 0.0
      %1804 = vmatpush.msra.mxu0 0.0
      %1805 = vmatpush.msra.mxu0 0.0
      %1806 = vmatpush.msra.mxu0 0.0
      %1807 = vmatpush.msra.mxu0 0.0
      %1808 = vmatpush.msra.mxu0 0.0
      %1809 = vmatpush.msra.mxu0 0.0
      %1810 = vmatpush.msra.mxu0 0.0
      %1811 = vmatpush.msra.mxu0 0.0
      %1812 = vmatpush.msra.mxu0 0.0
      %1813 = vmatpush.msra.mxu0 0.0
      %1814 = vmatpush.msra.mxu0 %v1765
      %1815 = vmatpush.msra.mxu0 %v1764
      %1816 = vmatmul.f32.gmra.mxu0 %v1796
      %v1817 = vpop.f32.mrf.mxu0
      %v1818 = vadd.f32 0.0, %v1817
      %1819 = vmatmul.f32.gmra.mxu0 %v1798
      %v1820 = vpop.f32.mrf.mxu0
      %v1821 = vadd.f32 0.0, %v1820
      %1822 = vdwg.mxu0
      %v1823 = vperm.slane %v1698, 0
      %v1824 = vperm.slane %v1734, 0
      %v1825 = vperm.slane %v1735, 0
      %v1826 = vperm.slane %v1736, 0
      %v1827 = vperm.slane %v1702, 0
      %v1828 = vperm.slane %v1740, 0
      %v1829 = vperm.slane %v1741, 0
      %v1830 = vperm.slane %v1742, 0
      %v1831 = vperm.slane %v1706, 0
      %v1832 = vperm.slane %v1746, 0
      %v1833 = vperm.slane %v1747, 0
      %v1834 = vperm.slane %v1748, 0
      %v1835 = vperm.slane %v1710, 0
      %v1836 = vperm.slane %v1752, 0
      %v1837 = vperm.slane %v1753, 0
      %v1838 = vperm.slane %v1754, 0
      %v1839 = vsel %vm496, %v1824, %v1823
      %v1840 = vsel %vm498, %v1825, %v1839
      %v1841 = vsel %vm500, %v1826, %v1840
      %v1842 = vsel %vm502, %v1827, %v1841
      %v1843 = vsel %vm504, %v1828, %v1842
      %v1844 = vsel %vm506, %v1829, %v1843
      %v1845 = vsel %vm508, %v1830, %v1844
      %v1846 = vsel %vm496, %v1832, %v1831
      %v1847 = vsel %vm498, %v1833, %v1846
      %v1848 = vsel %vm500, %v1834, %v1847
      %v1849 = vsel %vm502, %v1835, %v1848
      %v1850 = vsel %vm504, %v1836, %v1849
      %v1851 = vsel %vm506, %v1837, %v1850
      %v1852 = vsel %vm508, %v1838, %v1851
      %v1853 = vsel %vm1667, %v1845, 0
      %v1855 = vsel %vm1667, %v1852, 0
      %1857 = vmatpush.msra.mxu0 0.0
      %1858 = vmatpush.msra.mxu0 0.0
      %1859 = vmatpush.msra.mxu0 0.0
      %1860 = vmatpush.msra.mxu0 0.0
      %1861 = vmatpush.msra.mxu0 0.0
      %1862 = vmatpush.msra.mxu0 0.0
      %1863 = vmatpush.msra.mxu0 0.0
      %1864 = vmatpush.msra.mxu0 0.0
      %1865 = vmatpush.msra.mxu0 0.0
      %1866 = vmatpush.msra.mxu0 0.0
      %1867 = vmatpush.msra.mxu0 0.0
      %1868 = vmatpush.msra.mxu0 0.0
      %1869 = vmatpush.msra.mxu0 0.0
      %1870 = vmatpush.msra.mxu0 0.0
      %1871 = vmatpush.msra.mxu0 %v1762
      %1872 = vmatpush.msra.mxu0 %v1761
      %1873 = vmatmul.f32.gmra.mxu0 %v1853
      %v1874 = vpop.f32.mrf.mxu0
      %v1875 = vadd.f32 %v1818, %v1874
      %1876 = vmatmul.f32.gmra.mxu0 %v1855
      %v1877 = vpop.f32.mrf.mxu0
      %v1878 = vadd.f32 %v1821, %v1877
      %1879 = vdwg.mxu0
      %s1880 = scalar_lea.vmem %s3, 32
      %v1881 = vld [vmem:[%s1880] sm:$0xff]
      %v1882 = vld [vmem:[%s1880 + $0x8] sm:$0xff]
      %v1883 = vperm.slane %v1699, 0
      %v1884 = vperm.slane %v1703, 0
      %v1885 = vperm.slane %v1707, 0
      %v1886 = vperm.slane %v1711, 0
      %v1887 = vsel %vm496, %v1825, %v1824
      %v1888 = vsel %vm498, %v1826, %v1887
      %v1889 = vsel %vm500, %v1883, %v1888
      %v1890 = vsel %vm502, %v1828, %v1889
      %v1891 = vsel %vm504, %v1829, %v1890
      %v1892 = vsel %vm506, %v1830, %v1891
      %v1893 = vsel %vm508, %v1884, %v1892
      %v1894 = vsel %vm496, %v1833, %v1832
      %v1895 = vsel %vm498, %v1834, %v1894
      %v1896 = vsel %vm500, %v1885, %v1895
      %v1897 = vsel %vm502, %v1836, %v1896
      %v1898 = vsel %vm504, %v1837, %v1897
      %v1899 = vsel %vm506, %v1838, %v1898
      %v1900 = vsel %vm508, %v1886, %v1899
      %v1901 = vsel %vm1667, %v1893, 0
      %v1903 = vsel %vm1667, %v1900, 0
      %1905 = vmatpush.msra.mxu0 0.0
      %1906 = vmatpush.msra.mxu0 0.0
      %1907 = vmatpush.msra.mxu0 0.0
      %1908 = vmatpush.msra.mxu0 0.0
      %1909 = vmatpush.msra.mxu0 0.0
      %1910 = vmatpush.msra.mxu0 0.0
      %1911 = vmatpush.msra.mxu0 0.0
      %1912 = vmatpush.msra.mxu0 0.0
      %1913 = vmatpush.msra.mxu0 0.0
      %1914 = vmatpush.msra.mxu0 0.0
      %1915 = vmatpush.msra.mxu0 0.0
      %1916 = vmatpush.msra.mxu0 0.0
      %1917 = vmatpush.msra.mxu0 0.0
      %1918 = vmatpush.msra.mxu0 0.0
      %1919 = vmatpush.msra.mxu0 %v1882
      %1920 = vmatpush.msra.mxu0 %v1881
      %1921 = vmatmul.f32.gmra.mxu0 %v1901
      %v1922 = vpop.f32.mrf.mxu0
      %v1923 = vadd.f32 0.0, %v1922
      %1924 = vmatmul.f32.gmra.mxu0 %v1903
      %v1925 = vpop.f32.mrf.mxu0
      %v1926 = vadd.f32 0.0, %v1925
      %1927 = vdwg.mxu0
      %v1928 = vadd.f32 %v1875, %v1923
      %v1929 = vadd.f32 %v1878, %v1926
      %s1930 = scalar_lea.vmem %s3, 48
      %v1931 = vld [vmem:[%s1930] sm:$0xff]
      %v1932 = vld [vmem:[%s1930 + $0x8] sm:$0xff]
      %v1933 = vperm.slane %v1700, 0
      %v1934 = vperm.slane %v1737, 0
      %v1935 = vperm.slane %v1738, 0
      %v1936 = vperm.slane %v1739, 0
      %v1937 = vperm.slane %v1704, 0
      %v1938 = vperm.slane %v1743, 0
      %v1939 = vperm.slane %v1744, 0
      %v1940 = vperm.slane %v1745, 0
      %v1941 = vperm.slane %v1708, 0
      %v1942 = vperm.slane %v1749, 0
      %v1943 = vperm.slane %v1750, 0
      %v1944 = vperm.slane %v1751, 0
      %v1945 = vperm.slane %v1712, 0
      %v1946 = vperm.slane %v1755, 0
      %v1947 = vperm.slane %v1756, 0
      %v1948 = vperm.slane %v1757, 0
      %v1949 = vsel %vm496, %v1934, %v1933
      %v1950 = vsel %vm498, %v1935, %v1949
      %v1951 = vsel %vm500, %v1936, %v1950
      %v1952 = vsel %vm502, %v1937, %v1951
      %v1953 = vsel %vm504, %v1938, %v1952
      %v1954 = vsel %vm506, %v1939, %v1953
      %v1955 = vsel %vm508, %v1940, %v1954
      %v1956 = vsel %vm496, %v1942, %v1941
      %v1957 = vsel %vm498, %v1943, %v1956
      %v1958 = vsel %vm500, %v1944, %v1957
      %v1959 = vsel %vm502, %v1945, %v1958
      %v1960 = vsel %vm504, %v1946, %v1959
      %v1961 = vsel %vm506, %v1947, %v1960
      %v1962 = vsel %vm508, %v1948, %v1961
      %v1963 = vsel %vm1667, %v1955, 0
      %v1965 = vsel %vm1667, %v1962, 0
      %1967 = vmatpush.msra.mxu0 0.0
      %1968 = vmatpush.msra.mxu0 0.0
      %1969 = vmatpush.msra.mxu0 0.0
      %1970 = vmatpush.msra.mxu0 0.0
      %1971 = vmatpush.msra.mxu0 0.0
      %1972 = vmatpush.msra.mxu0 0.0
      %1973 = vmatpush.msra.mxu0 0.0
      %1974 = vmatpush.msra.mxu0 0.0
      %1975 = vmatpush.msra.mxu0 0.0
      %1976 = vmatpush.msra.mxu0 0.0
      %1977 = vmatpush.msra.mxu0 0.0
      %1978 = vmatpush.msra.mxu0 0.0
      %1979 = vmatpush.msra.mxu0 0.0
      %1980 = vmatpush.msra.mxu0 0.0
      %1981 = vmatpush.msra.mxu0 %v1932
      %1982 = vmatpush.msra.mxu0 %v1931
      %1983 = vmatmul.f32.gmra.mxu0 %v1963
      %v1984 = vpop.f32.mrf.mxu0
      %v1985 = vadd.f32 0.0, %v1984
      %1986 = vmatmul.f32.gmra.mxu0 %v1965
      %v1987 = vpop.f32.mrf.mxu0
      %v1988 = vadd.f32 0.0, %v1987
      %1989 = vdwg.mxu0
      %v1990 = vadd.f32 %v1928, %v1985
      %v1991 = vadd.f32 %v1929, %v1988
      %s1992 = scalar_lea.vmem %s3, 64
      %v1993 = vld [vmem:[%s1992] sm:$0xff]
      %v1994 = vld [vmem:[%s1992 + $0x8] sm:$0xff]
      %v1995 = vperm.slane %v1700, 1
      %v1996 = vperm.slane %v1737, 1
      %v1997 = vperm.slane %v1738, 1
      %v1998 = vperm.slane %v1739, 1
      %v1999 = vperm.slane %v1704, 1
      %v2000 = vperm.slane %v1743, 1
      %v2001 = vperm.slane %v1744, 1
      %v2002 = vperm.slane %v1745, 1
      %v2003 = vperm.slane %v1708, 1
      %v2004 = vperm.slane %v1749, 1
      %v2005 = vperm.slane %v1750, 1
      %v2006 = vperm.slane %v1751, 1
      %v2007 = vperm.slane %v1712, 1
      %v2008 = vperm.slane %v1755, 1
      %v2009 = vperm.slane %v1756, 1
      %v2010 = vperm.slane %v1757, 1
      %v2011 = vsel %vm496, %v1996, %v1995
      %v2012 = vsel %vm498, %v1997, %v2011
      %v2013 = vsel %vm500, %v1998, %v2012
      %v2014 = vsel %vm502, %v1999, %v2013
      %v2015 = vsel %vm504, %v2000, %v2014
      %v2016 = vsel %vm506, %v2001, %v2015
      %v2017 = vsel %vm508, %v2002, %v2016
      %v2018 = vsel %vm496, %v2004, %v2003
      %v2019 = vsel %vm498, %v2005, %v2018
      %v2020 = vsel %vm500, %v2006, %v2019
      %v2021 = vsel %vm502, %v2007, %v2020
      %v2022 = vsel %vm504, %v2008, %v2021
      %v2023 = vsel %vm506, %v2009, %v2022
      %v2024 = vsel %vm508, %v2010, %v2023
      %v2025 = vsel %vm1667, %v2017, 0
      %v2027 = vsel %vm1667, %v2024, 0
      %2029 = vmatpush.msra.mxu0 0.0
      %2030 = vmatpush.msra.mxu0 0.0
      %2031 = vmatpush.msra.mxu0 0.0
      %2032 = vmatpush.msra.mxu0 0.0
      %2033 = vmatpush.msra.mxu0 0.0
      %2034 = vmatpush.msra.mxu0 0.0
      %2035 = vmatpush.msra.mxu0 0.0
      %2036 = vmatpush.msra.mxu0 0.0
      %2037 = vmatpush.msra.mxu0 0.0
      %2038 = vmatpush.msra.mxu0 0.0
      %2039 = vmatpush.msra.mxu0 0.0
      %2040 = vmatpush.msra.mxu0 0.0
      %2041 = vmatpush.msra.mxu0 0.0
      %2042 = vmatpush.msra.mxu0 0.0
      %2043 = vmatpush.msra.mxu0 %v1994
      %2044 = vmatpush.msra.mxu0 %v1993
      %2045 = vmatmul.f32.gmra.mxu0 %v2025
      %v2046 = vpop.f32.mrf.mxu0
      %v2047 = vadd.f32 0.0, %v2046
      %2048 = vmatmul.f32.gmra.mxu0 %v2027
      %v2049 = vpop.f32.mrf.mxu0
      %v2050 = vadd.f32 0.0, %v2049
      %2051 = vdwg.mxu0
      %v2052 = vadd.f32 %v1990, %v2047
      %v2053 = vadd.f32 %v1991, %v2050
      %s2054 = scalar_lea.vmem %s3, 80
      %v2055 = vld [vmem:[%s2054] sm:$0xff]
      %v2056 = vld [vmem:[%s2054 + $0x8] sm:$0xff]
      %v2057 = vperm.slane %v1701, 0
      %v2058 = vperm.slane %v1705, 0
      %v2059 = vperm.slane %v1709, 0
      %v2060 = vperm.slane %v1713, 0
      %v2061 = vsel %vm496, %v1935, %v1934
      %v2062 = vsel %vm498, %v1936, %v2061
      %v2063 = vsel %vm500, %v2057, %v2062
      %v2064 = vsel %vm502, %v1938, %v2063
      %v2065 = vsel %vm504, %v1939, %v2064
      %v2066 = vsel %vm506, %v1940, %v2065
      %v2067 = vsel %vm508, %v2058, %v2066
      %v2068 = vsel %vm496, %v1943, %v1942
      %v2069 = vsel %vm498, %v1944, %v2068
      %v2070 = vsel %vm500, %v2059, %v2069
      %v2071 = vsel %vm502, %v1946, %v2070
      %v2072 = vsel %vm504, %v1947, %v2071
      %v2073 = vsel %vm506, %v1948, %v2072
      %v2074 = vsel %vm508, %v2060, %v2073
      %v2075 = vsel %vm1667, %v2067, 0
      %v2077 = vsel %vm1667, %v2074, 0
      %2079 = vmatpush.msra.mxu0 0.0
      %2080 = vmatpush.msra.mxu0 0.0
      %2081 = vmatpush.msra.mxu0 0.0
      %2082 = vmatpush.msra.mxu0 0.0
      %2083 = vmatpush.msra.mxu0 0.0
      %2084 = vmatpush.msra.mxu0 0.0
      %2085 = vmatpush.msra.mxu0 0.0
      %2086 = vmatpush.msra.mxu0 0.0
      %2087 = vmatpush.msra.mxu0 0.0
      %2088 = vmatpush.msra.mxu0 0.0
      %2089 = vmatpush.msra.mxu0 0.0
      %2090 = vmatpush.msra.mxu0 0.0
      %2091 = vmatpush.msra.mxu0 0.0
      %2092 = vmatpush.msra.mxu0 0.0
      %2093 = vmatpush.msra.mxu0 %v2056
      %2094 = vmatpush.msra.mxu0 %v2055
      %2095 = vmatmul.f32.gmra.mxu0 %v2075
      %v2096 = vpop.f32.mrf.mxu0
      %v2097 = vadd.f32 0.0, %v2096
      %2098 = vmatmul.f32.gmra.mxu0 %v2077
      %v2099 = vpop.f32.mrf.mxu0
      %v2100 = vadd.f32 0.0, %v2099
      %2101 = vdwg.mxu0
      %v2102 = vadd.f32 %v2052, %v2097
      %v2103 = vadd.f32 %v2053, %v2100
      %s2104 = scalar_lea.vmem %s3, 96
      %v2105 = vld [vmem:[%s2104] sm:$0xff]
      %v2106 = vld [vmem:[%s2104 + $0x8] sm:$0xff]
      %v2107 = vperm.slane %v1714, 0
      %v2108 = vperm.slane %v1758, 0
      %v2109 = vperm.slane %v1759, 0
      %v2110 = vperm.slane %v1760, 0
      %v2111 = vsel %vm496, %v1828, %v1827
      %v2112 = vsel %vm498, %v1829, %v2111
      %v2113 = vsel %vm500, %v1830, %v2112
      %v2114 = vsel %vm502, %v1831, %v2113
      %v2115 = vsel %vm504, %v1832, %v2114
      %v2116 = vsel %vm506, %v1833, %v2115
      %v2117 = vsel %vm508, %v1834, %v2116
      %v2118 = vsel %vm496, %v1836, %v1835
      %v2119 = vsel %vm498, %v1837, %v2118
      %v2120 = vsel %vm500, %v1838, %v2119
      %v2121 = vsel %vm502, %v2107, %v2120
      %v2122 = vsel %vm504, %v2108, %v2121
      %v2123 = vsel %vm506, %v2109, %v2122
      %v2124 = vsel %vm508, %v2110, %v2123
      %v2125 = vsel %vm1667, %v2117, 0
      %v2127 = vsel %vm1667, %v2124, 0
      %2129 = vmatpush.msra.mxu0 0.0
      %2130 = vmatpush.msra.mxu0 0.0
      %2131 = vmatpush.msra.mxu0 0.0
      %2132 = vmatpush.msra.mxu0 0.0
      %2133 = vmatpush.msra.mxu0 0.0
      %2134 = vmatpush.msra.mxu0 0.0
      %2135 = vmatpush.msra.mxu0 0.0
      %2136 = vmatpush.msra.mxu0 0.0
      %2137 = vmatpush.msra.mxu0 0.0
      %2138 = vmatpush.msra.mxu0 0.0
      %2139 = vmatpush.msra.mxu0 0.0
      %2140 = vmatpush.msra.mxu0 0.0
      %2141 = vmatpush.msra.mxu0 0.0
      %2142 = vmatpush.msra.mxu0 0.0
      %2143 = vmatpush.msra.mxu0 %v2106
      %2144 = vmatpush.msra.mxu0 %v2105
      %2145 = vmatmul.f32.gmra.mxu0 %v2125
      %v2146 = vpop.f32.mrf.mxu0
      %v2147 = vadd.f32 0.0, %v2146
      %2148 = vmatmul.f32.gmra.mxu0 %v2127
      %v2149 = vpop.f32.mrf.mxu0
      %v2150 = vadd.f32 0.0, %v2149
      %2151 = vdwg.mxu0
      %v2152 = vadd.f32 %v2102, %v2147
      %v2153 = vadd.f32 %v2103, %v2150
      %s2154 = scalar_lea.vmem %s3, 112
      %v2155 = vld [vmem:[%s2154] sm:$0xff]
      %v2156 = vld [vmem:[%s2154 + $0x8] sm:$0xff]
      %v2157 = vperm.slane %v1714, 1
      %v2158 = vperm.slane %v1758, 1
      %v2159 = vperm.slane %v1759, 1
      %v2160 = vperm.slane %v1760, 1
      %v2161 = vsel %vm496, %v1771, %v1770
      %v2162 = vsel %vm498, %v1772, %v2161
      %v2163 = vsel %vm500, %v1773, %v2162
      %v2164 = vsel %vm502, %v1774, %v2163
      %v2165 = vsel %vm504, %v1775, %v2164
      %v2166 = vsel %vm506, %v1776, %v2165
      %v2167 = vsel %vm508, %v1777, %v2166
      %v2168 = vsel %vm496, %v1779, %v1778
      %v2169 = vsel %vm498, %v1780, %v2168
      %v2170 = vsel %vm500, %v1781, %v2169
      %v2171 = vsel %vm502, %v2157, %v2170
      %v2172 = vsel %vm504, %v2158, %v2171
      %v2173 = vsel %vm506, %v2159, %v2172
      %v2174 = vsel %vm508, %v2160, %v2173
      %v2175 = vsel %vm1667, %v2167, 0
      %v2177 = vsel %vm1667, %v2174, 0
      %2179 = vmatpush.msra.mxu0 0.0
      %2180 = vmatpush.msra.mxu0 0.0
      %2181 = vmatpush.msra.mxu0 0.0
      %2182 = vmatpush.msra.mxu0 0.0
      %2183 = vmatpush.msra.mxu0 0.0
      %2184 = vmatpush.msra.mxu0 0.0
      %2185 = vmatpush.msra.mxu0 0.0
      %2186 = vmatpush.msra.mxu0 0.0
      %2187 = vmatpush.msra.mxu0 0.0
      %2188 = vmatpush.msra.mxu0 0.0
      %2189 = vmatpush.msra.mxu0 0.0
      %2190 = vmatpush.msra.mxu0 0.0
      %2191 = vmatpush.msra.mxu0 0.0
      %2192 = vmatpush.msra.mxu0 0.0
      %2193 = vmatpush.msra.mxu0 %v2156
      %2194 = vmatpush.msra.mxu0 %v2155
      %2195 = vmatmul.f32.gmra.mxu0 %v2175
      %v2196 = vpop.f32.mrf.mxu0
      %v2197 = vadd.f32 0.0, %v2196
      %2198 = vmatmul.f32.gmra.mxu0 %v2177
      %v2199 = vpop.f32.mrf.mxu0
      %v2200 = vadd.f32 0.0, %v2199
      %2201 = vdwg.mxu0
      %v2202 = vadd.f32 %v2152, %v2197
      %v2203 = vadd.f32 %v2153, %v2200
      %s2204 = scalar_lea.vmem %s3, 128
      %v2205 = vld [vmem:[%s2204] sm:$0xff]
      %v2206 = vld [vmem:[%s2204 + $0x8] sm:$0xff]
      %v2207 = vperm.slane %v1715, 0
      %v2208 = vsel %vm496, %v1829, %v1828
      %v2209 = vsel %vm498, %v1830, %v2208
      %v2210 = vsel %vm500, %v1884, %v2209
      %v2211 = vsel %vm502, %v1832, %v2210
      %v2212 = vsel %vm504, %v1833, %v2211
      %v2213 = vsel %vm506, %v1834, %v2212
      %v2214 = vsel %vm508, %v1885, %v2213
      %v2215 = vsel %vm496, %v1837, %v1836
      %v2216 = vsel %vm498, %v1838, %v2215
      %v2217 = vsel %vm500, %v1886, %v2216
      %v2218 = vsel %vm502, %v2108, %v2217
      %v2219 = vsel %vm504, %v2109, %v2218
      %v2220 = vsel %vm506, %v2110, %v2219
      %v2221 = vsel %vm508, %v2207, %v2220
      %v2222 = vsel %vm1667, %v2214, 0
      %v2224 = vsel %vm1667, %v2221, 0
      %2226 = vmatpush.msra.mxu0 0.0
      %2227 = vmatpush.msra.mxu0 0.0
      %2228 = vmatpush.msra.mxu0 0.0
      %2229 = vmatpush.msra.mxu0 0.0
      %2230 = vmatpush.msra.mxu0 0.0
      %2231 = vmatpush.msra.mxu0 0.0
      %2232 = vmatpush.msra.mxu0 0.0
      %2233 = vmatpush.msra.mxu0 0.0
      %2234 = vmatpush.msra.mxu0 0.0
      %2235 = vmatpush.msra.mxu0 0.0
      %2236 = vmatpush.msra.mxu0 0.0
      %2237 = vmatpush.msra.mxu0 0.0
      %2238 = vmatpush.msra.mxu0 0.0
      %2239 = vmatpush.msra.mxu0 0.0
      %2240 = vmatpush.msra.mxu0 %v2206
      %2241 = vmatpush.msra.mxu0 %v2205
      %2242 = vmatmul.f32.gmra.mxu0 %v2222
      %v2243 = vpop.f32.mrf.mxu0
      %v2244 = vadd.f32 0.0, %v2243
      %2245 = vmatmul.f32.gmra.mxu0 %v2224
      %v2246 = vpop.f32.mrf.mxu0
      %v2247 = vadd.f32 0.0, %v2246
      %2248 = vdwg.mxu0
      %v2249 = vadd.f32 %v2202, %v2244
      %v2250 = vadd.f32 %v2203, %v2247
      %v2251 = vld [vmem:[%s4] sm:$0x1]
      %v2253 = vperm.slane %v2251, 0
      %v2255 = vadd.f32 %v2249, %v2253
      %v2256 = vadd.f32 %v2250, %v2253
      %2257 = vxpose.xlu0.b32.start [1/16] %v2255, 128
      %2258 = vxpose.xlu0.b32.cont [2/16] %v2256, 128
      %2259 = vxpose.xlu0.b32.cont [3/16] 0.0, 128
      %2260 = vxpose.xlu0.b32.cont [4/16] 0.0, 128
      %2261 = vxpose.xlu0.b32.cont [5/16] 0.0, 128
      %2262 = vxpose.xlu0.b32.cont [6/16] 0.0, 128
      %2263 = vxpose.xlu0.b32.cont [7/16] 0.0, 128
      %2264 = vxpose.xlu0.b32.cont [8/16] 0.0, 128
      %2265 = vxpose.xlu0.b32.cont [9/16] 0.0, 128
      %2266 = vxpose.xlu0.b32.cont [10/16] 0.0, 128
      %2267 = vxpose.xlu0.b32.cont [11/16] 0.0, 128
      %2268 = vxpose.xlu0.b32.cont [12/16] 0.0, 128
      %2269 = vxpose.xlu0.b32.cont [13/16] 0.0, 128
      %2270 = vxpose.xlu0.b32.cont [14/16] 0.0, 128
      %2271 = vxpose.xlu0.b32.cont [15/16] 0.0, 128
      %2272 = vxpose.xlu0.b32.end [16/16] 0.0, 128
      %v2273 = vpop.trf.xlu0
      %v2274 = vpop.trf.xlu0
      %v2275 = vpop.trf.xlu0
      %v2276 = vpop.trf.xlu0
      %v2277 = vpop.trf.xlu0
      %v2278 = vpop.trf.xlu0
      %v2279 = vpop.trf.xlu0
      %v2280 = vpop.trf.xlu0
      %v2281 = vpop.trf.xlu0
      %v2282 = vpop.trf.xlu0
      %v2283 = vpop.trf.xlu0
      %v2284 = vpop.trf.xlu0
      %v2285 = vpop.trf.xlu0
      %v2286 = vpop.trf.xlu0
      %v2287 = vpop.trf.xlu0
      %v2288 = vpop.trf.xlu0
      %2289 = vst.msk [vmem:[%s224] sm:$0xff] %vm1667, %v2273
      %2290 = vst.msk [vmem:[%s224 + $0x8] sm:$0xff] %vm1667, %v2274
      %2291 = vst.msk [vmem:[%s224 + $0x10] sm:$0xff] %vm1667, %v2275
      %2292 = vst.msk [vmem:[%s224 + $0x18] sm:$0xff] %vm1667, %v2276
      %p2293 = scmp.lt.s32.totalorder %s16, 1
      %s2294 = scalar_select %p2293, %s16, 1
      %s2295 = smul.addr %s2294, 4
      %s2296 = smul.addr %s2295, 8
      %s2297 = scalar_lea.vmem %s5, %s2296
      // Predicated region
      $region41: #{tpu_custom_call.1} parent=39 // pred_check
        %p2298 = pneg %p144
      $region42: #{tpu_custom_call.1} parent=39 // pred_check_branch
        %2300 = sbr.rel (%p2298) target = $region44
      $region43: #{tpu_custom_call.1} parent=39 // pred_region
        _
      $region44: #{tpu_custom_call.1} parent=39 // pred_fallthru
        _
    $region40: #{tpu_custom_call.1} parent=5 // pred_fallthru
      _
    %p2301 = scmp.le.s32.totalorder 2, %s11
    // Predicated region
    $region45: #{tpu_custom_call.1} parent=5 // pred_check
      %p2302 = pneg %p2301
    $region46: #{tpu_custom_call.1} parent=5 // pred_check_branch
      %2304 = sbr.rel (%p2302) target = $region48
    $region47: #{tpu_custom_call.1} parent=5 // pred_region
      %s2305 = ssub.s32 %s11, 2
      // Predicated region
      $region49: #{tpu_custom_call.1} parent=47 // pred_check
        %p2306 = pneg %p150
      $region50: #{tpu_custom_call.1} parent=47 // pred_check_branch
        %2308 = sbr.rel (%p2306) target = $region52
      $region51: #{tpu_custom_call.1} parent=47 // pred_region
        %p2309 = scmp.lt.s32.totalorder %s17, 1
        %s2310 = scalar_select %p2309, %s17, 1
        %s2311 = smul.addr %s2310, 4
        %s2312 = smul.addr %s2311, 8
        %s2313 = scalar_lea.vmem %s5, %s2312
      $region52: #{tpu_custom_call.1} parent=47 // pred_fallthru
        _
    $region48: #{tpu_custom_call.1} parent=5 // pred_fallthru
      _
  $region6: #{tpu_custom_call.1} parent=0 // loop_footer
    %s15 = sadd.s32 1, %s11
  $region7: #{tpu_custom_call.1} parent=0 // loop_footer_branch
    %10 = sbr.rel target = $region3
  $region8: #{tpu_custom_call.1} parent=0 // loop_exit
    _

</llo_original>
